<compile_context>
chip_gen: v5e
topology: v5e:2x2
jax: 0.10.0
libtpu: 0.0.40
codegen_flags: <defaults>
</compile_context>

<pallas_src>
import functools

import jax
import jax.numpy as jnp
from jax.experimental import pallas as pl
from jax.experimental.pallas import tpu as pltpu

EPS = 1e-5  # PyTorch BatchNorm2d default eps
DILATIONS = (1, 2, 4)


# ------------------------------ fused kernel --------------------------------

def _fused_dilated_cnn_kernel(x_ref, z_ref, w_ref, p_ref, out_ref, *, ci):
    B, L, E = x_ref.shape                    # x already sliced to [B, L, E]
    N = B * L
    Inp = z_ref.shape[1]
    Ce = E + Inp
    Ci = ci
    f32 = jnp.float32
    inv_n = 1.0 / N

    # Static row offsets inside the packed weight slab (must match pack_params).
    OFF_W1 = 0                    # 3 x [Ci, Ce]
    OFF_WOUT = OFF_W1 + 3 * Ci    # [E, Ce]
    OFF_W2 = OFF_WOUT + E         # 3 x [3*Ci, Ci]  (lane-padded to Ce)
    OFF_W3 = OFF_W2 + 9 * Ci      # 3 x [Ce, Ci]    (lane-padded to Ce)

    # Sequence position of every flattened row (hoisted; reused by all masks).
    l_idx = jax.lax.broadcasted_iota(jnp.int32, (N, 1), 0) % L

    # ---- cnn input h = [x_matrix | z_matrix] as one flat [N, Ce] slab -------
    #   x_matrix[b, 0]   = bos (zeros)
    #   x_matrix[b, l>0] = x[b, l]        (== cat([bos, x[:,1:-1]], dim=1))
    x2 = x_ref[...].astype(f32).reshape(N, E)
    x2 = jnp.where(l_idx >= 1, x2, 0.0)
    z2 = jnp.broadcast_to(z_ref[...].astype(f32)[:, None, :],
                          (B, L, Inp)).reshape(N, Inp)
    h = jnp.concatenate([x2, z2], axis=1)                         # [N, Ce]

    def dot_t(a, w):
        # a [N, K] contracted with w [M, K] -> [N, M]   (1x1 conv / Linear)
        return jax.lax.dot_general(a, w, (((1,), (1,)), ((), ())),
                                   preferred_element_type=f32)

    def bn(y, g, b):
        # Training-mode BN over the B*L rows.  Single-pass stats: one fused
        # reduction of [y | y*y], v = E[y^2] - m^2, then fused scale/shift.
        C = y.shape[1]
        stats = jnp.sum(jnp.concatenate([y, y * y], axis=1),
                        axis=0, keepdims=True) * inv_n            # [1, 2C]
        m = stats[:, :C]
        v = stats[:, C:] - m * m
        scale = g * jax.lax.rsqrt(v + EPS)
        return y * scale + (b - m * scale)

    def causal_shift(t, s):
        # out[r] = t[r - s] if (r mod L) >= s else 0.  The mask zeroes both the
        # roll wrap-around and cross-batch leakage.
        return jnp.where(l_idx >= s, pltpu.roll(t, shift=s, axis=0), 0.0)

    bnp = p_ref[...].astype(f32)                                  # [rows, Ce]

    for li, d in enumerate(DILATIONS):
        g1 = bnp[0 + li:1 + li, :Ci];   b1 = bnp[3 + li:4 + li, :Ci]
        g2 = bnp[6 + li:7 + li, :Ci];   b2 = bnp[9 + li:10 + li, :Ci]
        g3 = bnp[12 + li:13 + li, :];   b3 = bnp[15 + li:16 + li, :]

        # --- conv1 (1x1, no bias) -> BN -> ReLU   (dropout rate 0 -> identity)
        w1 = w_ref[OFF_W1 + li * Ci: OFF_W1 + (li + 1) * Ci, :]        # [Ci, Ce]
        y1 = jnp.maximum(bn(dot_t(h, w1), g1, b1), 0.0)

        # --- conv2: causal dilated (1,3) conv == ONE matmul against the
        #     tap-concatenated weight, then per-tap lane slices + causal shifts.
        #     out[l] = sum_k W2[k] @ y1[l - (2-k)*d]
        w2cat = w_ref[OFF_W2 + li * 3 * Ci:
                      OFF_W2 + (li + 1) * 3 * Ci, :][:, :Ci]            # [3Ci, Ci]
        yt = dot_t(y1, w2cat)                                           # [N, 3Ci]
        y2 = yt[:, 2 * Ci:3 * Ci]                                       # tap 2: shift 0
        if d < L:                                                       # tap 1: shift d
            y2 = y2 + causal_shift(yt[:, Ci:2 * Ci], d)
        if 2 * d < L:                                                   # tap 0: shift 2d
            y2 = y2 + causal_shift(yt[:, :Ci], 2 * d)
        y2 = jnp.maximum(bn(y2, g2, b2), 0.0)

        # --- conv3 (1x1) -> BN -> residual add -> ReLU
        w3 = w_ref[OFF_W3 + li * Ce: OFF_W3 + (li + 1) * Ce, :][:, :Ci]  # [Ce, Ci]
        h = jnp.maximum(bn(dot_t(y2, w3), g3, b3) + h, 0.0)

    # ---- output Linear + bos-row prepend via two direct slice stores --------
    w_out = w_ref[OFF_WOUT: OFF_WOUT + E, :]                            # [E, Ce]
    b_out = bnp[18:19, :E]                                              # [1, E]
    out = dot_t(h, w_out) + b_out                                       # [N, E]
    out_ref[:, 0:1, :] = jnp.zeros((B, 1, E), out_ref.dtype)
    out_ref[:, 1:, :] = out.reshape(B, L, E).astype(out_ref.dtype)


# --------------------------- parameter packing -------------------------------

def pack_params(params):
    """Pack the 11 weight / BN arrays into two contiguous f32 slabs.

    Returns (w_slab [R, Ce], p_slab [rows, Ce], Ci).  Sections are 8-row
    aligned so the kernel's static ref slices stay tile-aligned.
    """
    Ci = int(params["w1"].shape[1])
    Ce = int(params["w1"].shape[2])

    def pad_cols(a):
        return jnp.pad(a, ((0, 0), (0, Ce - a.shape[-1])))

    # Matmul-weight slab (kernel layout: w1 | w_out | w2(tap-concat) | w3).
    w_rows = [
        params["w1"].reshape(3 * Ci, Ce),                       # 3 x [Ci, Ce]
        params["w_out"],                                        # [E,  Ce]
        pad_cols(params["w2"].reshape(9 * Ci, Ci)),             # 3 x [3Ci, Ci]
        pad_cols(params["w3"].reshape(3 * Ce, Ci)),             # 3 x [Ce, Ci]
    ]
    w_slab = jnp.concatenate(w_rows, axis=0).astype(jnp.float32)
    pad = (-w_slab.shape[0]) % 8
    if pad:
        w_slab = jnp.pad(w_slab, ((0, pad), (0, 0)))

    # BN / bias slab: rows 0-2 g1, 3-5 b1, 6-8 g2, 9-11 b2, 12-14 g3,
    # 15-17 b3, 18 b_out (all lane-padded to Ce).
    def row3(a):  # [3, 1, C] -> [3, Ce]
        return pad_cols(a.reshape(3, a.shape[-1]))

    p_rows = [row3(params["g1"]), row3(params["b1"]),
              row3(params["g2"]), row3(params["b2"]),
              row3(params["g3"]), row3(params["b3"]),
              pad_cols(params["b_out"])]
    p_slab = jnp.concatenate(p_rows, axis=0).astype(jnp.float32)
    pad = (-p_slab.shape[0]) % 8
    if pad:
        p_slab = jnp.pad(p_slab, ((0, pad), (0, 0)))

    return w_slab, p_slab, Ci


# -------------------------------- wrapper ------------------------------------

@functools.partial(jax.jit, static_argnames=("ci",))
def dilated_cnn_forward(x, z, w_slab, p_slab, *, ci):
    """x: [B, seq_len, emb], z: [B, input_size] -> [B, seq_len, emb]"""
    B, S, E = x.shape
    L = S - 1
    vspec = pl.BlockSpec(memory_space=pltpu.MemorySpace.VMEM)
    kernel = functools.partial(_fused_dilated_cnn_kernel, ci=ci)
    return pl.pallas_call(
        kernel,
        out_shape=jax.ShapeDtypeStruct((B, S, E), x.dtype),
        in_specs=[vspec] * 4,
        out_specs=vspec,
    )(x[:, :L, :], z, w_slab, p_slab)


# ---------------------------- pure-JAX reference ----------------------------

def _layer_ref(x, p, li, d):
    B, L, Ce = x.shape

    def bn(y, g, b):
        m = y.mean(axis=(0, 1), keepdims=True)
        v = ((y - m) ** 2).mean(axis=(0, 1), keepdims=True)
        return (y - m) / jnp.sqrt(v + EPS) * g + b

    y1 = jax.nn.relu(bn(jnp.einsum("blc,ic->bli", x, p["w1"][li]),
                        p["g1"][li], p["b1"][li]))
    yp = jnp.pad(y1, ((0, 0), (2 * d, 0), (0, 0)))
    y2 = sum(jnp.einsum("blc,ic->bli", yp[:, k * d:k * d + L, :], p["w2"][li, k])
             for k in range(3))
    y2 = jax.nn.relu(bn(y2, p["g2"][li], p["b2"][li]))
    y3 = bn(jnp.einsum("blc,ic->bli", y2, p["w3"][li]), p["g3"][li], p["b3"][li])
    return jax.nn.relu(y3 + x)


def dilated_cnn_ref(x, z, params):
    B, S, E = x.shape
    L = S - 1
    bos = jnp.zeros((B, 1, E), x.dtype)
    x_matrix = jnp.concatenate([bos, x[:, 1:-1, :]], axis=1)
    z_matrix = jnp.broadcast_to(z[:, None, :], (B, L, z.shape[-1]))
    h = jnp.concatenate([x_matrix, z_matrix], axis=2)
    for li, d in enumerate(DILATIONS):
        h = _layer_ref(h, params, li, d)
    out = jnp.einsum("blc,ec->ble", h, params["w_out"]) + params["b_out"]
    return jnp.concatenate([bos, out], axis=1)


# ------------------------------ parameter init ------------------------------

def init_params(key, emb, inp, internal):
    Ce = emb + inp
    Ci = internal
    ks = jax.random.split(key, 5)
    # kaiming_normal_: std = sqrt(2 / fan_in), fan_in = in_ch * kh * kw
    w1 = jax.random.normal(ks[0], (3, Ci, Ce)) * jnp.sqrt(2.0 / Ce)
    w2 = jax.random.normal(ks[1], (3, 3, Ci, Ci)) * jnp.sqrt(2.0 / (Ci * 3))
    w3 = jax.random.normal(ks[2], (3, Ce, Ci)) * jnp.sqrt(2.0 / Ci)
    bound = 1.0 / jnp.sqrt(Ce)
    w_out = jax.random.uniform(ks[3], (emb, Ce), minval=-bound, maxval=bound)
    b_out = jax.random.uniform(ks[4], (1, emb), minval=-bound, maxval=bound)
    return dict(
        w1=w1.astype(jnp.float32),
        g1=jnp.ones((3, 1, Ci), jnp.float32), b1=jnp.zeros((3, 1, Ci), jnp.float32),
        w2=w2.astype(jnp.float32),
        g2=jnp.ones((3, 1, Ci), jnp.float32), b2=jnp.zeros((3, 1, Ci), jnp.float32),
        w3=w3.astype(jnp.float32),
        g3=jnp.ones((3, 1, Ce), jnp.float32), b3=jnp.zeros((3, 1, Ce), jnp.float32),
        w_out=w_out.astype(jnp.float32), b_out=b_out.astype(jnp.float32),
    )


# ----------------------------------- main ------------------------------------

if __name__ == "__main__":
    EMB, DISTIL, DISPER, INTERNAL, SEQ_LEN, BATCH = 32, 8, 8, 24, 9, 2
    INP = DISTIL + DISPER     # config.distil_size + config.disper_size

    key = jax.random.PRNGKey(0)
    kx, kz, kp = jax.random.split(key, 3)
    x = jax.random.normal(kx, (BATCH, SEQ_LEN, EMB), jnp.float32)
    z = jax.random.normal(kz, (BATCH, INP), jnp.float32)
    params = init_params(kp, EMB, INP, INTERNAL)

    w_slab, p_slab, ci = pack_params(params)   # packed once, outside jit
    out = jax.block_until_ready(dilated_cnn_forward(x, z, w_slab, p_slab, ci=ci))
    ref = dilated_cnn_ref(x, z, params)

    assert out.shape == (BATCH, SEQ_LEN, EMB), out.shape
    assert jnp.allclose(out, ref, atol=5e-3, rtol=5e-3), float(jnp.max(jnp.abs(out - ref)))
    print("KERNEL_OK")
</pallas_src>

<mosaic_0001>
module attributes {stable_mosaic.version = 11 : i64} {
  func.func @_fused_dilated_cnn_kernel(%arg0: memref<2x8x32xf32, #tpu.memory_space<vmem>>, %arg1: memref<2x16xf32, #tpu.memory_space<vmem>>, %arg2: memref<464x48xf32, #tpu.memory_space<vmem>>, %arg3: memref<24x48xf32, #tpu.memory_space<vmem>>, %arg4: memref<2x9x32xf32, #tpu.memory_space<vmem>>) attributes {dimension_semantics = [], scalar_prefetch = 0 : i64, scratch_operands = 0 : i64, tpu.core_type = #tpu.core_type<tc>} {
    %0 = tpu.iota {dimensions = array<i32: 0>} : vector<16x1xi32>
    %c8_i32 = arith.constant 8 : i32
    %c0_i32 = arith.constant 0 : i32
    %1 = arith.cmpi eq, %c8_i32, %c0_i32 : i32
    %c1_i32 = arith.constant 1 : i32
    %2 = arith.select %1, %c1_i32, %c8_i32 : i32
    %3 = vector.broadcast %2 : i32 to vector<16x1xi32>
    %4 = arith.remsi %0, %3 : vector<16x1xi32>
    %c0_i32_0 = arith.constant 0 : i32
    %5 = vector.broadcast %c0_i32_0 : i32 to vector<16x1xi32>
    %6 = arith.cmpi ne, %4, %5 : vector<16x1xi32>
    %c0_i32_1 = arith.constant 0 : i32
    %7 = vector.broadcast %c0_i32_1 : i32 to vector<16x1xi32>
    %8 = arith.cmpi slt, %4, %7 : vector<16x1xi32>
    %c0_i32_2 = arith.constant 0 : i32
    %9 = arith.cmpi slt, %2, %c0_i32_2 : i32
    %10 = vector.broadcast %9 : i1 to vector<16x1xi1>
    %11 = vector.broadcast %10 : vector<16x1xi1> to vector<16x1xi1>
    %12 = arith.xori %8, %11 : vector<16x1xi1>
    %13 = arith.andi %12, %6 : vector<16x1xi1>
    %14 = vector.broadcast %2 : i32 to vector<16x1xi32>
    %15 = arith.addi %4, %14 : vector<16x1xi32>
    %16 = arith.select %13, %15, %4 : vector<16x1xi1>, vector<16x1xi32>
    %c0 = arith.constant 0 : index
    %c0_3 = arith.constant 0 : index
    %c0_4 = arith.constant 0 : index
    %17 = vector.load %arg0[%c0, %c0_3, %c0_4] : memref<2x8x32xf32, #tpu.memory_space<vmem>>, vector<2x8x32xf32>
    %18 = vector.shape_cast %17 : vector<2x8x32xf32> to vector<16x32xf32>
    %c1_i32_5 = arith.constant 1 : i32
    %19 = vector.broadcast %c1_i32_5 : i32 to vector<16x1xi32>
    %20 = arith.cmpi sge, %16, %19 : vector<16x1xi32>
    %cst = arith.constant 0.000000e+00 : f32
    %21 = vector.shape_cast %20 : vector<16x1xi1> to vector<16x1xi1>
    %22 = vector.broadcast %21 : vector<16x1xi1> to vector<16x32xi1>
    %23 = vector.broadcast %cst : f32 to vector<16x32xf32>
    %24 = arith.select %22, %18, %23 : vector<16x32xi1>, vector<16x32xf32>
    %c0_6 = arith.constant 0 : index
    %c0_7 = arith.constant 0 : index
    %25 = vector.load %arg1[%c0_6, %c0_7] : memref<2x16xf32, #tpu.memory_space<vmem>>, vector<2x16xf32>
    %26 = vector.shape_cast %25 : vector<2x16xf32> to vector<2x1x16xf32>
    %27 = vector.shape_cast %26 : vector<2x1x16xf32> to vector<2x1x16xf32>
    %28 = vector.broadcast %27 : vector<2x1x16xf32> to vector<2x8x16xf32>
    %29 = vector.shape_cast %28 : vector<2x8x16xf32> to vector<16x16xf32>
    %30 = tpu.concatenate %24, %29 in 1 : vector<16x32xf32>, vector<16x16xf32> -> vector<16x48xf32>
    %c0_8 = arith.constant 0 : index
    %c0_9 = arith.constant 0 : index
    %31 = vector.load %arg3[%c0_8, %c0_9] : memref<24x48xf32, #tpu.memory_space<vmem>>, vector<24x48xf32>
    %32 = vector.extract_strided_slice %31 {offsets = [0, 0], sizes = [1, 24], strides = [1, 1]} : vector<24x48xf32> to vector<1x24xf32>
    %33 = vector.extract_strided_slice %31 {offsets = [3, 0], sizes = [1, 24], strides = [1, 1]} : vector<24x48xf32> to vector<1x24xf32>
    %34 = vector.extract_strided_slice %31 {offsets = [6, 0], sizes = [1, 24], strides = [1, 1]} : vector<24x48xf32> to vector<1x24xf32>
    %35 = vector.extract_strided_slice %31 {offsets = [9, 0], sizes = [1, 24], strides = [1, 1]} : vector<24x48xf32> to vector<1x24xf32>
    %36 = vector.extract_strided_slice %31 {offsets = [12, 0], sizes = [1, 48], strides = [1, 1]} : vector<24x48xf32> to vector<1x48xf32>
    %37 = vector.extract_strided_slice %31 {offsets = [15, 0], sizes = [1, 48], strides = [1, 1]} : vector<24x48xf32> to vector<1x48xf32>
    %c0_10 = arith.constant 0 : index
    %c0_11 = arith.constant 0 : index
    %38 = vector.load %arg2[%c0_10, %c0_11] : memref<464x48xf32, #tpu.memory_space<vmem>>, vector<24x48xf32>
    %cst_12 = arith.constant dense<0.000000e+00> : vector<16x24xf32>
    %39 = tpu.matmul %30, %38, %cst_12 {dimension_numbers = #tpu.dot_dimension_numbers<[1], [1], [0], [0], [0, 0, 1, 0], [], []>} : vector<16x48xf32>, vector<24x48xf32>, vector<16x24xf32> -> vector<16x24xf32>
    %40 = arith.mulf %39, %39 : vector<16x24xf32>
    %41 = tpu.concatenate %39, %40 in 1 : vector<16x24xf32>, vector<16x24xf32> -> vector<16x48xf32>
    %cst_13 = arith.constant dense<0.000000e+00> : vector<48xf32>
    %42 = vector.multi_reduction <add>, %41, %cst_13 [0] : vector<16x48xf32> to vector<48xf32>
    %43 = vector.shape_cast %42 : vector<48xf32> to vector<1x48xf32>
    %cst_14 = arith.constant 6.250000e-02 : f32
    %44 = vector.broadcast %cst_14 : f32 to vector<1x48xf32>
    %45 = arith.mulf %43, %44 : vector<1x48xf32>
    %46 = vector.extract_strided_slice %45 {offsets = [0, 0], sizes = [1, 24], strides = [1, 1]} : vector<1x48xf32> to vector<1x24xf32>
    %47 = vector.extract_strided_slice %45 {offsets = [0, 24], sizes = [1, 24], strides = [1, 1]} : vector<1x48xf32> to vector<1x24xf32>
    %48 = arith.mulf %46, %46 : vector<1x24xf32>
    %49 = arith.subf %47, %48 : vector<1x24xf32>
    %cst_15 = arith.constant 9.99999974E-6 : f32
    %50 = vector.broadcast %cst_15 : f32 to vector<1x24xf32>
    %51 = arith.addf %49, %50 : vector<1x24xf32>
    %52 = math.rsqrt %51 : vector<1x24xf32>
    %53 = arith.mulf %32, %52 : vector<1x24xf32>
    %54 = vector.broadcast %53 : vector<1x24xf32> to vector<16x24xf32>
    %55 = arith.mulf %39, %54 : vector<16x24xf32>
    %56 = arith.mulf %46, %53 : vector<1x24xf32>
    %57 = arith.subf %33, %56 : vector<1x24xf32>
    %58 = vector.broadcast %57 : vector<1x24xf32> to vector<16x24xf32>
    %59 = arith.addf %55, %58 : vector<16x24xf32>
    %cst_16 = arith.constant 0.000000e+00 : f32
    %60 = vector.broadcast %cst_16 : f32 to vector<16x24xf32>
    %61 = arith.maximumf %59, %60 : vector<16x24xf32>
    %c104 = arith.constant 104 : index
    %c0_17 = arith.constant 0 : index
    %62 = vector.load %arg2[%c104, %c0_17] : memref<464x48xf32, #tpu.memory_space<vmem>>, vector<72x48xf32>
    %63 = vector.extract_strided_slice %62 {offsets = [0, 0], sizes = [72, 24], strides = [1, 1]} : vector<72x48xf32> to vector<72x24xf32>
    %cst_18 = arith.constant dense<0.000000e+00> : vector<16x72xf32>
    %64 = tpu.matmul %61, %63, %cst_18 {dimension_numbers = #tpu.dot_dimension_numbers<[1], [1], [0], [0], [0, 0, 1, 0], [], []>} : vector<16x24xf32>, vector<72x24xf32>, vector<16x72xf32> -> vector<16x72xf32>
    %65 = vector.extract_strided_slice %64 {offsets = [0, 48], sizes = [16, 24], strides = [1, 1]} : vector<16x72xf32> to vector<16x24xf32>
    %66 = vector.extract_strided_slice %64 {offsets = [0, 24], sizes = [16, 24], strides = [1, 1]} : vector<16x72xf32> to vector<16x24xf32>
    %c1_i32_19 = arith.constant 1 : i32
    %67 = vector.broadcast %c1_i32_19 : i32 to vector<16x1xi32>
    %68 = arith.cmpi sge, %16, %67 : vector<16x1xi32>
    %c1_i32_20 = arith.constant 1 : i32
    %69 = tpu.dynamic_rotate %66 by %c1_i32_20 dim 0 : vector<16x24xf32>, i32 -> vector<16x24xf32>
    %cst_21 = arith.constant 0.000000e+00 : f32
    %70 = vector.shape_cast %68 : vector<16x1xi1> to vector<16x1xi1>
    %71 = vector.broadcast %70 : vector<16x1xi1> to vector<16x24xi1>
    %72 = vector.broadcast %cst_21 : f32 to vector<16x24xf32>
    %73 = arith.select %71, %69, %72 : vector<16x24xi1>, vector<16x24xf32>
    %74 = arith.addf %65, %73 : vector<16x24xf32>
    %75 = vector.extract_strided_slice %64 {offsets = [0, 0], sizes = [16, 24], strides = [1, 1]} : vector<16x72xf32> to vector<16x24xf32>
    %c2_i32 = arith.constant 2 : i32
    %76 = vector.broadcast %c2_i32 : i32 to vector<16x1xi32>
    %77 = arith.cmpi sge, %16, %76 : vector<16x1xi32>
    %c2_i32_22 = arith.constant 2 : i32
    %78 = tpu.dynamic_rotate %75 by %c2_i32_22 dim 0 : vector<16x24xf32>, i32 -> vector<16x24xf32>
    %cst_23 = arith.constant 0.000000e+00 : f32
    %79 = vector.shape_cast %77 : vector<16x1xi1> to vector<16x1xi1>
    %80 = vector.broadcast %79 : vector<16x1xi1> to vector<16x24xi1>
    %81 = vector.broadcast %cst_23 : f32 to vector<16x24xf32>
    %82 = arith.select %80, %78, %81 : vector<16x24xi1>, vector<16x24xf32>
    %83 = arith.addf %74, %82 : vector<16x24xf32>
    %84 = arith.mulf %83, %83 : vector<16x24xf32>
    %85 = tpu.concatenate %83, %84 in 1 : vector<16x24xf32>, vector<16x24xf32> -> vector<16x48xf32>
    %cst_24 = arith.constant dense<0.000000e+00> : vector<48xf32>
    %86 = vector.multi_reduction <add>, %85, %cst_24 [0] : vector<16x48xf32> to vector<48xf32>
    %87 = vector.shape_cast %86 : vector<48xf32> to vector<1x48xf32>
    %cst_25 = arith.constant 6.250000e-02 : f32
    %88 = vector.broadcast %cst_25 : f32 to vector<1x48xf32>
    %89 = arith.mulf %87, %88 : vector<1x48xf32>
    %90 = vector.extract_strided_slice %89 {offsets = [0, 0], sizes = [1, 24], strides = [1, 1]} : vector<1x48xf32> to vector<1x24xf32>
    %91 = vector.extract_strided_slice %89 {offsets = [0, 24], sizes = [1, 24], strides = [1, 1]} : vector<1x48xf32> to vector<1x24xf32>
    %92 = arith.mulf %90, %90 : vector<1x24xf32>
    %93 = arith.subf %91, %92 : vector<1x24xf32>
    %cst_26 = arith.constant 9.99999974E-6 : f32
    %94 = vector.broadcast %cst_26 : f32 to vector<1x24xf32>
    %95 = arith.addf %93, %94 : vector<1x24xf32>
    %96 = math.rsqrt %95 : vector<1x24xf32>
    %97 = arith.mulf %34, %96 : vector<1x24xf32>
    %98 = vector.broadcast %97 : vector<1x24xf32> to vector<16x24xf32>
    %99 = arith.mulf %83, %98 : vector<16x24xf32>
    %100 = arith.mulf %90, %97 : vector<1x24xf32>
    %101 = arith.subf %35, %100 : vector<1x24xf32>
    %102 = vector.broadcast %101 : vector<1x24xf32> to vector<16x24xf32>
    %103 = arith.addf %99, %102 : vector<16x24xf32>
    %cst_27 = arith.constant 0.000000e+00 : f32
    %104 = vector.broadcast %cst_27 : f32 to vector<16x24xf32>
    %105 = arith.maximumf %103, %104 : vector<16x24xf32>
    %c320 = arith.constant 320 : index
    %c0_28 = arith.constant 0 : index
    %106 = vector.load %arg2[%c320, %c0_28] : memref<464x48xf32, #tpu.memory_space<vmem>>, vector<48x48xf32>
    %107 = vector.extract_strided_slice %106 {offsets = [0, 0], sizes = [48, 24], strides = [1, 1]} : vector<48x48xf32> to vector<48x24xf32>
    %cst_29 = arith.constant dense<0.000000e+00> : vector<16x48xf32>
    %108 = tpu.matmul %105, %107, %cst_29 {dimension_numbers = #tpu.dot_dimension_numbers<[1], [1], [0], [0], [0, 0, 1, 0], [], []>} : vector<16x24xf32>, vector<48x24xf32>, vector<16x48xf32> -> vector<16x48xf32>
    %109 = arith.mulf %108, %108 : vector<16x48xf32>
    %110 = tpu.concatenate %108, %109 in 1 : vector<16x48xf32>, vector<16x48xf32> -> vector<16x96xf32>
    %cst_30 = arith.constant dense<0.000000e+00> : vector<96xf32>
    %111 = vector.multi_reduction <add>, %110, %cst_30 [0] : vector<16x96xf32> to vector<96xf32>
    %112 = vector.shape_cast %111 : vector<96xf32> to vector<1x96xf32>
    %cst_31 = arith.constant 6.250000e-02 : f32
    %113 = vector.broadcast %cst_31 : f32 to vector<1x96xf32>
    %114 = arith.mulf %112, %113 : vector<1x96xf32>
    %115 = vector.extract_strided_slice %114 {offsets = [0, 0], sizes = [1, 48], strides = [1, 1]} : vector<1x96xf32> to vector<1x48xf32>
    %116 = vector.extract_strided_slice %114 {offsets = [0, 48], sizes = [1, 48], strides = [1, 1]} : vector<1x96xf32> to vector<1x48xf32>
    %117 = arith.mulf %115, %115 : vector<1x48xf32>
    %118 = arith.subf %116, %117 : vector<1x48xf32>
    %cst_32 = arith.constant 9.99999974E-6 : f32
    %119 = vector.broadcast %cst_32 : f32 to vector<1x48xf32>
    %120 = arith.addf %118, %119 : vector<1x48xf32>
    %121 = math.rsqrt %120 : vector<1x48xf32>
    %122 = arith.mulf %36, %121 : vector<1x48xf32>
    %123 = vector.broadcast %122 : vector<1x48xf32> to vector<16x48xf32>
    %124 = arith.mulf %108, %123 : vector<16x48xf32>
    %125 = arith.mulf %115, %122 : vector<1x48xf32>
    %126 = arith.subf %37, %125 : vector<1x48xf32>
    %127 = vector.broadcast %126 : vector<1x48xf32> to vector<16x48xf32>
    %128 = arith.addf %124, %127 : vector<16x48xf32>
    %129 = arith.addf %128, %30 : vector<16x48xf32>
    %cst_33 = arith.constant 0.000000e+00 : f32
    %130 = vector.broadcast %cst_33 : f32 to vector<16x48xf32>
    %131 = arith.maximumf %129, %130 : vector<16x48xf32>
    %132 = vector.extract_strided_slice %31 {offsets = [1, 0], sizes = [1, 24], strides = [1, 1]} : vector<24x48xf32> to vector<1x24xf32>
    %133 = vector.extract_strided_slice %31 {offsets = [4, 0], sizes = [1, 24], strides = [1, 1]} : vector<24x48xf32> to vector<1x24xf32>
    %134 = vector.extract_strided_slice %31 {offsets = [7, 0], sizes = [1, 24], strides = [1, 1]} : vector<24x48xf32> to vector<1x24xf32>
    %135 = vector.extract_strided_slice %31 {offsets = [10, 0], sizes = [1, 24], strides = [1, 1]} : vector<24x48xf32> to vector<1x24xf32>
    %136 = vector.extract_strided_slice %31 {offsets = [13, 0], sizes = [1, 48], strides = [1, 1]} : vector<24x48xf32> to vector<1x48xf32>
    %137 = vector.extract_strided_slice %31 {offsets = [16, 0], sizes = [1, 48], strides = [1, 1]} : vector<24x48xf32> to vector<1x48xf32>
    %c24 = arith.constant 24 : index
    %c0_34 = arith.constant 0 : index
    %138 = vector.load %arg2[%c24, %c0_34] : memref<464x48xf32, #tpu.memory_space<vmem>>, vector<24x48xf32>
    %cst_35 = arith.constant dense<0.000000e+00> : vector<16x24xf32>
    %139 = tpu.matmul %131, %138, %cst_35 {dimension_numbers = #tpu.dot_dimension_numbers<[1], [1], [0], [0], [0, 0, 1, 0], [], []>} : vector<16x48xf32>, vector<24x48xf32>, vector<16x24xf32> -> vector<16x24xf32>
    %140 = arith.mulf %139, %139 : vector<16x24xf32>
    %141 = tpu.concatenate %139, %140 in 1 : vector<16x24xf32>, vector<16x24xf32> -> vector<16x48xf32>
    %cst_36 = arith.constant dense<0.000000e+00> : vector<48xf32>
    %142 = vector.multi_reduction <add>, %141, %cst_36 [0] : vector<16x48xf32> to vector<48xf32>
    %143 = vector.shape_cast %142 : vector<48xf32> to vector<1x48xf32>
    %cst_37 = arith.constant 6.250000e-02 : f32
    %144 = vector.broadcast %cst_37 : f32 to vector<1x48xf32>
    %145 = arith.mulf %143, %144 : vector<1x48xf32>
    %146 = vector.extract_strided_slice %145 {offsets = [0, 0], sizes = [1, 24], strides = [1, 1]} : vector<1x48xf32> to vector<1x24xf32>
    %147 = vector.extract_strided_slice %145 {offsets = [0, 24], sizes = [1, 24], strides = [1, 1]} : vector<1x48xf32> to vector<1x24xf32>
    %148 = arith.mulf %146, %146 : vector<1x24xf32>
    %149 = arith.subf %147, %148 : vector<1x24xf32>
    %cst_38 = arith.constant 9.99999974E-6 : f32
    %150 = vector.broadcast %cst_38 : f32 to vector<1x24xf32>
    %151 = arith.addf %149, %150 : vector<1x24xf32>
    %152 = math.rsqrt %151 : vector<1x24xf32>
    %153 = arith.mulf %132, %152 : vector<1x24xf32>
    %154 = vector.broadcast %153 : vector<1x24xf32> to vector<16x24xf32>
    %155 = arith.mulf %139, %154 : vector<16x24xf32>
    %156 = arith.mulf %146, %153 : vector<1x24xf32>
    %157 = arith.subf %133, %156 : vector<1x24xf32>
    %158 = vector.broadcast %157 : vector<1x24xf32> to vector<16x24xf32>
    %159 = arith.addf %155, %158 : vector<16x24xf32>
    %cst_39 = arith.constant 0.000000e+00 : f32
    %160 = vector.broadcast %cst_39 : f32 to vector<16x24xf32>
    %161 = arith.maximumf %159, %160 : vector<16x24xf32>
    %c176 = arith.constant 176 : index
    %c0_40 = arith.constant 0 : index
    %162 = vector.load %arg2[%c176, %c0_40] : memref<464x48xf32, #tpu.memory_space<vmem>>, vector<72x48xf32>
    %163 = vector.extract_strided_slice %162 {offsets = [0, 0], sizes = [72, 24], strides = [1, 1]} : vector<72x48xf32> to vector<72x24xf32>
    %cst_41 = arith.constant dense<0.000000e+00> : vector<16x72xf32>
    %164 = tpu.matmul %161, %163, %cst_41 {dimension_numbers = #tpu.dot_dimension_numbers<[1], [1], [0], [0], [0, 0, 1, 0], [], []>} : vector<16x24xf32>, vector<72x24xf32>, vector<16x72xf32> -> vector<16x72xf32>
    %165 = vector.extract_strided_slice %164 {offsets = [0, 48], sizes = [16, 24], strides = [1, 1]} : vector<16x72xf32> to vector<16x24xf32>
    %166 = vector.extract_strided_slice %164 {offsets = [0, 24], sizes = [16, 24], strides = [1, 1]} : vector<16x72xf32> to vector<16x24xf32>
    %c2_i32_42 = arith.constant 2 : i32
    %167 = vector.broadcast %c2_i32_42 : i32 to vector<16x1xi32>
    %168 = arith.cmpi sge, %16, %167 : vector<16x1xi32>
    %c2_i32_43 = arith.constant 2 : i32
    %169 = tpu.dynamic_rotate %166 by %c2_i32_43 dim 0 : vector<16x24xf32>, i32 -> vector<16x24xf32>
    %cst_44 = arith.constant 0.000000e+00 : f32
    %170 = vector.shape_cast %168 : vector<16x1xi1> to vector<16x1xi1>
    %171 = vector.broadcast %170 : vector<16x1xi1> to vector<16x24xi1>
    %172 = vector.broadcast %cst_44 : f32 to vector<16x24xf32>
    %173 = arith.select %171, %169, %172 : vector<16x24xi1>, vector<16x24xf32>
    %174 = arith.addf %165, %173 : vector<16x24xf32>
    %175 = vector.extract_strided_slice %164 {offsets = [0, 0], sizes = [16, 24], strides = [1, 1]} : vector<16x72xf32> to vector<16x24xf32>
    %c4_i32 = arith.constant 4 : i32
    %176 = vector.broadcast %c4_i32 : i32 to vector<16x1xi32>
    %177 = arith.cmpi sge, %16, %176 : vector<16x1xi32>
    %c4_i32_45 = arith.constant 4 : i32
    %178 = tpu.dynamic_rotate %175 by %c4_i32_45 dim 0 : vector<16x24xf32>, i32 -> vector<16x24xf32>
    %cst_46 = arith.constant 0.000000e+00 : f32
    %179 = vector.shape_cast %177 : vector<16x1xi1> to vector<16x1xi1>
    %180 = vector.broadcast %179 : vector<16x1xi1> to vector<16x24xi1>
    %181 = vector.broadcast %cst_46 : f32 to vector<16x24xf32>
    %182 = arith.select %180, %178, %181 : vector<16x24xi1>, vector<16x24xf32>
    %183 = arith.addf %174, %182 : vector<16x24xf32>
    %184 = arith.mulf %183, %183 : vector<16x24xf32>
    %185 = tpu.concatenate %183, %184 in 1 : vector<16x24xf32>, vector<16x24xf32> -> vector<16x48xf32>
    %cst_47 = arith.constant dense<0.000000e+00> : vector<48xf32>
    %186 = vector.multi_reduction <add>, %185, %cst_47 [0] : vector<16x48xf32> to vector<48xf32>
    %187 = vector.shape_cast %186 : vector<48xf32> to vector<1x48xf32>
    %cst_48 = arith.constant 6.250000e-02 : f32
    %188 = vector.broadcast %cst_48 : f32 to vector<1x48xf32>
    %189 = arith.mulf %187, %188 : vector<1x48xf32>
    %190 = vector.extract_strided_slice %189 {offsets = [0, 0], sizes = [1, 24], strides = [1, 1]} : vector<1x48xf32> to vector<1x24xf32>
    %191 = vector.extract_strided_slice %189 {offsets = [0, 24], sizes = [1, 24], strides = [1, 1]} : vector<1x48xf32> to vector<1x24xf32>
    %192 = arith.mulf %190, %190 : vector<1x24xf32>
    %193 = arith.subf %191, %192 : vector<1x24xf32>
    %cst_49 = arith.constant 9.99999974E-6 : f32
    %194 = vector.broadcast %cst_49 : f32 to vector<1x24xf32>
    %195 = arith.addf %193, %194 : vector<1x24xf32>
    %196 = math.rsqrt %195 : vector<1x24xf32>
    %197 = arith.mulf %134, %196 : vector<1x24xf32>
    %198 = vector.broadcast %197 : vector<1x24xf32> to vector<16x24xf32>
    %199 = arith.mulf %183, %198 : vector<16x24xf32>
    %200 = arith.mulf %190, %197 : vector<1x24xf32>
    %201 = arith.subf %135, %200 : vector<1x24xf32>
    %202 = vector.broadcast %201 : vector<1x24xf32> to vector<16x24xf32>
    %203 = arith.addf %199, %202 : vector<16x24xf32>
    %cst_50 = arith.constant 0.000000e+00 : f32
    %204 = vector.broadcast %cst_50 : f32 to vector<16x24xf32>
    %205 = arith.maximumf %203, %204 : vector<16x24xf32>
    %c368 = arith.constant 368 : index
    %c0_51 = arith.constant 0 : index
    %206 = vector.load %arg2[%c368, %c0_51] : memref<464x48xf32, #tpu.memory_space<vmem>>, vector<48x48xf32>
    %207 = vector.extract_strided_slice %206 {offsets = [0, 0], sizes = [48, 24], strides = [1, 1]} : vector<48x48xf32> to vector<48x24xf32>
    %cst_52 = arith.constant dense<0.000000e+00> : vector<16x48xf32>
    %208 = tpu.matmul %205, %207, %cst_52 {dimension_numbers = #tpu.dot_dimension_numbers<[1], [1], [0], [0], [0, 0, 1, 0], [], []>} : vector<16x24xf32>, vector<48x24xf32>, vector<16x48xf32> -> vector<16x48xf32>
    %209 = arith.mulf %208, %208 : vector<16x48xf32>
    %210 = tpu.concatenate %208, %209 in 1 : vector<16x48xf32>, vector<16x48xf32> -> vector<16x96xf32>
    %cst_53 = arith.constant dense<0.000000e+00> : vector<96xf32>
    %211 = vector.multi_reduction <add>, %210, %cst_53 [0] : vector<16x96xf32> to vector<96xf32>
    %212 = vector.shape_cast %211 : vector<96xf32> to vector<1x96xf32>
    %cst_54 = arith.constant 6.250000e-02 : f32
    %213 = vector.broadcast %cst_54 : f32 to vector<1x96xf32>
    %214 = arith.mulf %212, %213 : vector<1x96xf32>
    %215 = vector.extract_strided_slice %214 {offsets = [0, 0], sizes = [1, 48], strides = [1, 1]} : vector<1x96xf32> to vector<1x48xf32>
    %216 = vector.extract_strided_slice %214 {offsets = [0, 48], sizes = [1, 48], strides = [1, 1]} : vector<1x96xf32> to vector<1x48xf32>
    %217 = arith.mulf %215, %215 : vector<1x48xf32>
    %218 = arith.subf %216, %217 : vector<1x48xf32>
    %cst_55 = arith.constant 9.99999974E-6 : f32
    %219 = vector.broadcast %cst_55 : f32 to vector<1x48xf32>
    %220 = arith.addf %218, %219 : vector<1x48xf32>
    %221 = math.rsqrt %220 : vector<1x48xf32>
    %222 = arith.mulf %136, %221 : vector<1x48xf32>
    %223 = vector.broadcast %222 : vector<1x48xf32> to vector<16x48xf32>
    %224 = arith.mulf %208, %223 : vector<16x48xf32>
    %225 = arith.mulf %215, %222 : vector<1x48xf32>
    %226 = arith.subf %137, %225 : vector<1x48xf32>
    %227 = vector.broadcast %226 : vector<1x48xf32> to vector<16x48xf32>
    %228 = arith.addf %224, %227 : vector<16x48xf32>
    %229 = arith.addf %228, %131 : vector<16x48xf32>
    %cst_56 = arith.constant 0.000000e+00 : f32
    %230 = vector.broadcast %cst_56 : f32 to vector<16x48xf32>
    %231 = arith.maximumf %229, %230 : vector<16x48xf32>
    %232 = vector.extract_strided_slice %31 {offsets = [2, 0], sizes = [1, 24], strides = [1, 1]} : vector<24x48xf32> to vector<1x24xf32>
    %233 = vector.extract_strided_slice %31 {offsets = [5, 0], sizes = [1, 24], strides = [1, 1]} : vector<24x48xf32> to vector<1x24xf32>
    %234 = vector.extract_strided_slice %31 {offsets = [8, 0], sizes = [1, 24], strides = [1, 1]} : vector<24x48xf32> to vector<1x24xf32>
    %235 = vector.extract_strided_slice %31 {offsets = [11, 0], sizes = [1, 24], strides = [1, 1]} : vector<24x48xf32> to vector<1x24xf32>
    %236 = vector.extract_strided_slice %31 {offsets = [14, 0], sizes = [1, 48], strides = [1, 1]} : vector<24x48xf32> to vector<1x48xf32>
    %237 = vector.extract_strided_slice %31 {offsets = [17, 0], sizes = [1, 48], strides = [1, 1]} : vector<24x48xf32> to vector<1x48xf32>
    %c48 = arith.constant 48 : index
    %c0_57 = arith.constant 0 : index
    %238 = vector.load %arg2[%c48, %c0_57] : memref<464x48xf32, #tpu.memory_space<vmem>>, vector<24x48xf32>
    %cst_58 = arith.constant dense<0.000000e+00> : vector<16x24xf32>
    %239 = tpu.matmul %231, %238, %cst_58 {dimension_numbers = #tpu.dot_dimension_numbers<[1], [1], [0], [0], [0, 0, 1, 0], [], []>} : vector<16x48xf32>, vector<24x48xf32>, vector<16x24xf32> -> vector<16x24xf32>
    %240 = arith.mulf %239, %239 : vector<16x24xf32>
    %241 = tpu.concatenate %239, %240 in 1 : vector<16x24xf32>, vector<16x24xf32> -> vector<16x48xf32>
    %cst_59 = arith.constant dense<0.000000e+00> : vector<48xf32>
    %242 = vector.multi_reduction <add>, %241, %cst_59 [0] : vector<16x48xf32> to vector<48xf32>
    %243 = vector.shape_cast %242 : vector<48xf32> to vector<1x48xf32>
    %cst_60 = arith.constant 6.250000e-02 : f32
    %244 = vector.broadcast %cst_60 : f32 to vector<1x48xf32>
    %245 = arith.mulf %243, %244 : vector<1x48xf32>
    %246 = vector.extract_strided_slice %245 {offsets = [0, 0], sizes = [1, 24], strides = [1, 1]} : vector<1x48xf32> to vector<1x24xf32>
    %247 = vector.extract_strided_slice %245 {offsets = [0, 24], sizes = [1, 24], strides = [1, 1]} : vector<1x48xf32> to vector<1x24xf32>
    %248 = arith.mulf %246, %246 : vector<1x24xf32>
    %249 = arith.subf %247, %248 : vector<1x24xf32>
    %cst_61 = arith.constant 9.99999974E-6 : f32
    %250 = vector.broadcast %cst_61 : f32 to vector<1x24xf32>
    %251 = arith.addf %249, %250 : vector<1x24xf32>
    %252 = math.rsqrt %251 : vector<1x24xf32>
    %253 = arith.mulf %232, %252 : vector<1x24xf32>
    %254 = vector.broadcast %253 : vector<1x24xf32> to vector<16x24xf32>
    %255 = arith.mulf %239, %254 : vector<16x24xf32>
    %256 = arith.mulf %246, %253 : vector<1x24xf32>
    %257 = arith.subf %233, %256 : vector<1x24xf32>
    %258 = vector.broadcast %257 : vector<1x24xf32> to vector<16x24xf32>
    %259 = arith.addf %255, %258 : vector<16x24xf32>
    %cst_62 = arith.constant 0.000000e+00 : f32
    %260 = vector.broadcast %cst_62 : f32 to vector<16x24xf32>
    %261 = arith.maximumf %259, %260 : vector<16x24xf32>
    %c248 = arith.constant 248 : index
    %c0_63 = arith.constant 0 : index
    %262 = vector.load %arg2[%c248, %c0_63] : memref<464x48xf32, #tpu.memory_space<vmem>>, vector<72x48xf32>
    %263 = vector.extract_strided_slice %262 {offsets = [0, 0], sizes = [72, 24], strides = [1, 1]} : vector<72x48xf32> to vector<72x24xf32>
    %cst_64 = arith.constant dense<0.000000e+00> : vector<16x72xf32>
    %264 = tpu.matmul %261, %263, %cst_64 {dimension_numbers = #tpu.dot_dimension_numbers<[1], [1], [0], [0], [0, 0, 1, 0], [], []>} : vector<16x24xf32>, vector<72x24xf32>, vector<16x72xf32> -> vector<16x72xf32>
    %265 = vector.extract_strided_slice %264 {offsets = [0, 48], sizes = [16, 24], strides = [1, 1]} : vector<16x72xf32> to vector<16x24xf32>
    %266 = vector.extract_strided_slice %264 {offsets = [0, 24], sizes = [16, 24], strides = [1, 1]} : vector<16x72xf32> to vector<16x24xf32>
    %c4_i32_65 = arith.constant 4 : i32
    %267 = vector.broadcast %c4_i32_65 : i32 to vector<16x1xi32>
    %268 = arith.cmpi sge, %16, %267 : vector<16x1xi32>
    %c4_i32_66 = arith.constant 4 : i32
    %269 = tpu.dynamic_rotate %266 by %c4_i32_66 dim 0 : vector<16x24xf32>, i32 -> vector<16x24xf32>
    %cst_67 = arith.constant 0.000000e+00 : f32
    %270 = vector.shape_cast %268 : vector<16x1xi1> to vector<16x1xi1>
    %271 = vector.broadcast %270 : vector<16x1xi1> to vector<16x24xi1>
    %272 = vector.broadcast %cst_67 : f32 to vector<16x24xf32>
    %273 = arith.select %271, %269, %272 : vector<16x24xi1>, vector<16x24xf32>
    %274 = arith.addf %265, %273 : vector<16x24xf32>
    %275 = arith.mulf %274, %274 : vector<16x24xf32>
    %276 = tpu.concatenate %274, %275 in 1 : vector<16x24xf32>, vector<16x24xf32> -> vector<16x48xf32>
    %cst_68 = arith.constant dense<0.000000e+00> : vector<48xf32>
    %277 = vector.multi_reduction <add>, %276, %cst_68 [0] : vector<16x48xf32> to vector<48xf32>
    %278 = vector.shape_cast %277 : vector<48xf32> to vector<1x48xf32>
    %cst_69 = arith.constant 6.250000e-02 : f32
    %279 = vector.broadcast %cst_69 : f32 to vector<1x48xf32>
    %280 = arith.mulf %278, %279 : vector<1x48xf32>
    %281 = vector.extract_strided_slice %280 {offsets = [0, 0], sizes = [1, 24], strides = [1, 1]} : vector<1x48xf32> to vector<1x24xf32>
    %282 = vector.extract_strided_slice %280 {offsets = [0, 24], sizes = [1, 24], strides = [1, 1]} : vector<1x48xf32> to vector<1x24xf32>
    %283 = arith.mulf %281, %281 : vector<1x24xf32>
    %284 = arith.subf %282, %283 : vector<1x24xf32>
    %cst_70 = arith.constant 9.99999974E-6 : f32
    %285 = vector.broadcast %cst_70 : f32 to vector<1x24xf32>
    %286 = arith.addf %284, %285 : vector<1x24xf32>
    %287 = math.rsqrt %286 : vector<1x24xf32>
    %288 = arith.mulf %234, %287 : vector<1x24xf32>
    %289 = vector.broadcast %288 : vector<1x24xf32> to vector<16x24xf32>
    %290 = arith.mulf %274, %289 : vector<16x24xf32>
    %291 = arith.mulf %281, %288 : vector<1x24xf32>
    %292 = arith.subf %235, %291 : vector<1x24xf32>
    %293 = vector.broadcast %292 : vector<1x24xf32> to vector<16x24xf32>
    %294 = arith.addf %290, %293 : vector<16x24xf32>
    %cst_71 = arith.constant 0.000000e+00 : f32
    %295 = vector.broadcast %cst_71 : f32 to vector<16x24xf32>
    %296 = arith.maximumf %294, %295 : vector<16x24xf32>
    %c416 = arith.constant 416 : index
    %c0_72 = arith.constant 0 : index
    %297 = vector.load %arg2[%c416, %c0_72] : memref<464x48xf32, #tpu.memory_space<vmem>>, vector<48x48xf32>
    %298 = vector.extract_strided_slice %297 {offsets = [0, 0], sizes = [48, 24], strides = [1, 1]} : vector<48x48xf32> to vector<48x24xf32>
    %cst_73 = arith.constant dense<0.000000e+00> : vector<16x48xf32>
    %299 = tpu.matmul %296, %298, %cst_73 {dimension_numbers = #tpu.dot_dimension_numbers<[1], [1], [0], [0], [0, 0, 1, 0], [], []>} : vector<16x24xf32>, vector<48x24xf32>, vector<16x48xf32> -> vector<16x48xf32>
    %300 = arith.mulf %299, %299 : vector<16x48xf32>
    %301 = tpu.concatenate %299, %300 in 1 : vector<16x48xf32>, vector<16x48xf32> -> vector<16x96xf32>
    %cst_74 = arith.constant dense<0.000000e+00> : vector<96xf32>
    %302 = vector.multi_reduction <add>, %301, %cst_74 [0] : vector<16x96xf32> to vector<96xf32>
    %303 = vector.shape_cast %302 : vector<96xf32> to vector<1x96xf32>
    %cst_75 = arith.constant 6.250000e-02 : f32
    %304 = vector.broadcast %cst_75 : f32 to vector<1x96xf32>
    %305 = arith.mulf %303, %304 : vector<1x96xf32>
    %306 = vector.extract_strided_slice %305 {offsets = [0, 0], sizes = [1, 48], strides = [1, 1]} : vector<1x96xf32> to vector<1x48xf32>
    %307 = vector.extract_strided_slice %305 {offsets = [0, 48], sizes = [1, 48], strides = [1, 1]} : vector<1x96xf32> to vector<1x48xf32>
    %308 = arith.mulf %306, %306 : vector<1x48xf32>
    %309 = arith.subf %307, %308 : vector<1x48xf32>
    %cst_76 = arith.constant 9.99999974E-6 : f32
    %310 = vector.broadcast %cst_76 : f32 to vector<1x48xf32>
    %311 = arith.addf %309, %310 : vector<1x48xf32>
    %312 = math.rsqrt %311 : vector<1x48xf32>
    %313 = arith.mulf %236, %312 : vector<1x48xf32>
    %314 = vector.broadcast %313 : vector<1x48xf32> to vector<16x48xf32>
    %315 = arith.mulf %299, %314 : vector<16x48xf32>
    %316 = arith.mulf %306, %313 : vector<1x48xf32>
    %317 = arith.subf %237, %316 : vector<1x48xf32>
    %318 = vector.broadcast %317 : vector<1x48xf32> to vector<16x48xf32>
    %319 = arith.addf %315, %318 : vector<16x48xf32>
    %320 = arith.addf %319, %231 : vector<16x48xf32>
    %cst_77 = arith.constant 0.000000e+00 : f32
    %321 = vector.broadcast %cst_77 : f32 to vector<16x48xf32>
    %322 = arith.maximumf %320, %321 : vector<16x48xf32>
    %c72 = arith.constant 72 : index
    %c0_78 = arith.constant 0 : index
    %323 = vector.load %arg2[%c72, %c0_78] : memref<464x48xf32, #tpu.memory_space<vmem>>, vector<32x48xf32>
    %324 = vector.extract_strided_slice %31 {offsets = [18, 0], sizes = [1, 32], strides = [1, 1]} : vector<24x48xf32> to vector<1x32xf32>
    %cst_79 = arith.constant dense<0.000000e+00> : vector<16x32xf32>
    %325 = tpu.matmul %322, %323, %cst_79 {dimension_numbers = #tpu.dot_dimension_numbers<[1], [1], [0], [0], [0, 0, 1, 0], [], []>} : vector<16x48xf32>, vector<32x48xf32>, vector<16x32xf32> -> vector<16x32xf32>
    %326 = vector.broadcast %324 : vector<1x32xf32> to vector<16x32xf32>
    %327 = arith.addf %325, %326 : vector<16x32xf32>
    %cst_80 = arith.constant 0.000000e+00 : f32
    %328 = vector.broadcast %cst_80 : f32 to vector<2x1x32xf32>
    %c0_81 = arith.constant 0 : index
    %c0_82 = arith.constant 0 : index
    %c0_83 = arith.constant 0 : index
    %329 = vector.load %arg4[%c0_81, %c0_82, %c0_83] : memref<2x9x32xf32, #tpu.memory_space<vmem>>, vector<2x1x32xf32>
    tpu.vector_store %arg4[%c0_81, %c0_82, %c0_83], %328 {strides = array<i32>} : memref<2x9x32xf32, #tpu.memory_space<vmem>>, vector<2x1x32xf32>,
    %330 = vector.shape_cast %327 : vector<16x32xf32> to vector<2x8x32xf32>
    %c0_84 = arith.constant 0 : index
    %c1 = arith.constant 1 : index
    %c0_85 = arith.constant 0 : index
    %331 = vector.load %arg4[%c0_84, %c1, %c0_85] : memref<2x9x32xf32, #tpu.memory_space<vmem>>, vector<2x8x32xf32>
    tpu.vector_store %arg4[%c0_84, %c1, %c0_85], %330 {strides = array<i32>} : memref<2x9x32xf32, #tpu.memory_space<vmem>>, vector<2x8x32xf32>,
    return
  }
}

</mosaic_0001>

<llo_original>
// kernel: dilated_cnn_forward.1
$region0: #{dilated_cnn_forward.1}
  #allocation0 [shape = 'u32[]', space=smem, size = 0x4, offset = 0x4, fixed_abs, tag = 'smem constant byte address 0x4 - core index']
  #allocation1 [shape = 'u32[72,128]{1,0:T(1,128)}', space=vmem, size = 0x9000, scoped, tag = 'internal scratch']
  %s0 = inlined_call_operand.vmem [shape: f32[2,8,32], index: 0, kind: input, shape index: {}]
  %s1 = inlined_call_operand.vmem [shape: f32[2,16], index: 1, kind: input, shape index: {}]
  %s2 = inlined_call_operand.vmem [shape: f32[464,48], index: 2, kind: input, shape index: {}]
  %s3 = inlined_call_operand.vmem [shape: f32[24,48], index: 3, kind: input, shape index: {}]
  %s4 = inlined_call_operand.vmem [shape: f32[2,9,32], index: 4, kind: output, shape index: {}]
  %s5 = sld [smem:[#allocation0]]
  $region26: #{dilated_cnn_forward.1} parent=0
    _
  %s7 = ssub.s32 1, %s5
  %s8 = scalar_select 0, %s7, %s5
  // Predicated region
  $region2: #{dilated_cnn_forward.1} parent=0 // pred_check
    _
  $region3: #{dilated_cnn_forward.1} parent=0 // pred_check_branch
    %10 = sbr.rel (0) target = $region5
  $region4: #{dilated_cnn_forward.1} parent=0 // pred_region
    _
  $region5: #{dilated_cnn_forward.1} parent=0 // pred_fallthru
    _
  // Predicated region
  $region6: #{dilated_cnn_forward.1} parent=0 // pred_check
    _
  $region7: #{dilated_cnn_forward.1} parent=0 // pred_check_branch
    %12 = sbr.rel (0) target = $region9
  $region8: #{dilated_cnn_forward.1} parent=0 // pred_region
    _
  $region9: #{dilated_cnn_forward.1} parent=0 // pred_fallthru
    _
  // Predicated region
  $region10: #{dilated_cnn_forward.1} parent=0 // pred_check
    _
  $region11: #{dilated_cnn_forward.1} parent=0 // pred_check_branch
    %14 = sbr.rel (0) target = $region13
  $region12: #{dilated_cnn_forward.1} parent=0 // pred_region
    _
  $region13: #{dilated_cnn_forward.1} parent=0 // pred_fallthru
    _
  // Predicated region
  $region14: #{dilated_cnn_forward.1} parent=0 // pred_check
    _
  $region15: #{dilated_cnn_forward.1} parent=0 // pred_check_branch
    %16 = sbr.rel (0) target = $region17
  $region16: #{dilated_cnn_forward.1} parent=0 // pred_region
    _
  $region17: #{dilated_cnn_forward.1} parent=0 // pred_fallthru
    _
  %v17 = vlaneseq
  %v18 = vshrl.u32 %v17, 7
  %v19 = vadd.s32 %v18, 8
  %vm20 = vcmp.lt.s32.totalorder %v18, 0
  %v21 = vsub.s32 0, %v18
  %v22 = vsel %vm20, %v21, %v18
  %v23 = vshrl.u32 %v22, 3
  %v24 = vand.u32 %v22, 7
  %v25 = vsub.s32 0, %v24
  %v26 = vsel %vm20, %v25, %v24
  %vm27 = vcmp.lt.s32.totalorder %v19, 0
  %v28 = vsub.s32 0, %v19
  %v29 = vsel %vm27, %v28, %v19
  %v30 = vshrl.u32 %v29, 3
  %v31 = vand.u32 %v29, 7
  %v32 = vsub.s32 0, %v31
  %v33 = vsel %vm27, %v32, %v31
  %vm34 = vcmp.ne.s32.totalorder %v26, 0
  %vm35 = vcmp.ne.s32.totalorder %v33, 0
  %vm36 = vcmp.lt.s32.totalorder %v26, 0
  %vm37 = vcmp.lt.s32.totalorder %v33, 0
  %vm38 = vmand %vm36, %vm34
  %vm39 = vmand %vm37, %vm35
  %v40 = vadd.s32 %v26, 8
  %v41 = vadd.s32 %v33, 8
  %v42 = vsel %vm38, %v40, %v26
  %v43 = vsel %vm39, %v41, %v33
  %v44 = vld [vmem:[%s0] sm:$0xff]
  %v45 = vld [vmem:[%s0 + $0x8] sm:$0xff]
  %vm46 = vcmp.ge.s32.totalorder %v42, 1
  %vm47 = vcmp.ge.s32.totalorder %v43, 1
  %v48 = vsel %vm46, 1, 0
  %v49 = vsel %vm47, 1, 0
  %vm50 = vcmp.eq.s32.totalorder %v48, 1
  %vm51 = vcmp.eq.s32.totalorder %v49, 1
  %v52 = vsel %vm50, %v44, 0.0
  %v53 = vsel %vm51, %v45, 0.0
  %v54 = vld [vmem:[%s1] sm:$0x3]
  %v56 = vrot.slane %v54, 1
  %v57 = vperm.slane %v54, 0
  %v58 = vperm.slane %v56, 0
  %59 = vrot.lane.b32.xlu0 %v57, 32
  %v60 = vpop.permute.xlu0 %59
  %61 = vrot.lane.b32.xlu0 %v58, 32
  %v62 = vpop.permute.xlu0 %61
  %vm65 = vcmask 261120
  %v66 = vsel %vm65, %v52, %v60
  %v67 = vsel %vm65, %v53, %v62
  %v68 = vld [vmem:[%s3] sm:$0xff]
  %v69 = vld [vmem:[%s3 + $0x8] sm:$0xff]
  %v70 = vld [vmem:[%s3 + $0x10] sm:$0xff]
  %v71 = vld [vmem:[%s2] sm:$0xff]
  %v72 = vld [vmem:[%s2 + $0x8] sm:$0xff]
  %v73 = vld [vmem:[%s2 + $0x10] sm:$0xff]
  %vm74 = vcmask 392192
  %v76 = vsel %vm74, %v66, 0
  %v79 = vsel %vm74, %v67, 0
  %v82 = vsel %vm74, %v71, 0
  %v85 = vsel %vm74, %v72, 0
  %v88 = vsel %vm74, %v73, 0
  %90 = vmatpush.xpose.msra.mxu0 0.0
  %91 = vmatpush.xpose.msra.mxu0 0.0
  %92 = vmatpush.xpose.msra.mxu0 0.0
  %93 = vmatpush.xpose.msra.mxu0 0.0
  %94 = vmatpush.xpose.msra.mxu0 0.0
  %95 = vmatpush.xpose.msra.mxu0 0.0
  %96 = vmatpush.xpose.msra.mxu0 0.0
  %97 = vmatpush.xpose.msra.mxu0 0.0
  %98 = vmatpush.xpose.msra.mxu0 0.0
  %99 = vmatpush.xpose.msra.mxu0 0.0
  %100 = vmatpush.xpose.msra.mxu0 0.0
  %101 = vmatpush.xpose.msra.mxu0 0.0
  %102 = vmatpush.xpose.msra.mxu0 0.0
  %103 = vmatpush.xpose.msra.mxu0 %v88
  %104 = vmatpush.xpose.msra.mxu0 %v85
  %105 = vmatpush.xpose.msra.mxu0 %v82
  %106 = vmatmul.f32.gmra.mxu0 %v76
  %v107 = vpop.f32.mrf.mxu0
  %v108 = vadd.f32 0.0, %v107
  %109 = vmatmul.f32.gmra.mxu0 %v79
  %v110 = vpop.f32.mrf.mxu0
  %v111 = vadd.f32 0.0, %v110
  %112 = vdwg.mxu0
  %v113 = vmul.f32 %v108, %v108
  %v114 = vmul.f32 %v111, %v111
  %117 = vrot.lane.b32.xlu0 %v113, 24
  %v118 = vpop.permute.xlu0 %117
  %119 = vrot.lane.b32.xlu0 %v114, 24
  %v120 = vpop.permute.xlu0 %119
  %vm123 = vcmask 195584
  %v124 = vsel %vm123, %v108, %v118
  %v125 = vsel %vm123, %v111, %v120
  %v126 = vsel %vm74, %v124, 0.0
  %v127 = vsel %vm74, %v125, 0.0
  %v128 = vadd.f32 %v126, %v127
  %v129 = vrot.slane %v128, 4
  %v130 = vadd.f32 %v128, %v129
  %v131 = vrot.slane %v130, 2
  %v132 = vadd.f32 %v130, %v131
  %v133 = vrot.slane %v132, 1
  %v134 = vadd.f32 %v132, %v133
  %v135 = vmul.f32 %v134, 0.0625
  %v136 = vmul.f32 %v135, %v135
  %138 = vrot.lane.b32.xlu0 %v136, 24
  %v139 = vpop.permute.xlu0 %138
  %v141 = vsub.f32 %v135, %v139
  %v142 = vadd.f32 %v141, 1e-05
  %v143 = vrsqrt.pop %v142
  %v144 = vmul.f32 %v143, %v142
  %v145 = vmul.f32 %v144, %v143
  %v146 = vmul.f32 0.5, %v145
  %v147 = vsub.f32 1.5, %v146
  %v148 = vmul.f32 %v143, %v147
  %vm149 = vweird.f32 %v142
  %vm150 = vweird.f32 %v143
  %vm151 = vmor %vm149, %vm150
  %v152 = vsel %vm151, %v143, %v148
  %154 = vrot.lane.b32.xlu0 %v152, 104
  %v155 = vpop.permute.xlu0 %154
  %v157 = vmul.f32 %v68, %v155
  %v158 = vperm.slane %v157, 0
  %v159 = vmul.f32 %v108, %v158
  %v160 = vmul.f32 %v111, %v158
  %v161 = vmul.f32 %v135, %v157
  %v163 = vrot.slane %v161, 5
  %v165 = vsub.f32 %v68, %v163
  %v166 = vperm.slane %v165, 3
  %v167 = vadd.f32 %v159, %v166
  %v168 = vadd.f32 %v160, %v166
  %v169 = vmax.f32 %v167, 0.0
  %v170 = vmax.f32 %v168, 0.0
  %v171 = vld [vmem:[%s2 + $0x68] sm:$0xff]
  %v172 = vld [vmem:[%s2 + $0x70] sm:$0xff]
  %v173 = vld [vmem:[%s2 + $0x78] sm:$0xff]
  %v174 = vld [vmem:[%s2 + $0x80] sm:$0xff]
  %v175 = vld [vmem:[%s2 + $0x88] sm:$0xff]
  %v176 = vld [vmem:[%s2 + $0x90] sm:$0xff]
  %v177 = vld [vmem:[%s2 + $0x98] sm:$0xff]
  %v178 = vld [vmem:[%s2 + $0xa0] sm:$0xff]
  %v179 = vld [vmem:[%s2 + $0xa8] sm:$0xff]
  %v181 = vsel %vm123, %v169, 0
  %v184 = vsel %vm123, %v170, 0
  %v187 = vsel %vm123, %v171, 0
  %v190 = vsel %vm123, %v172, 0
  %v193 = vsel %vm123, %v173, 0
  %v196 = vsel %vm123, %v174, 0
  %v199 = vsel %vm123, %v175, 0
  %v202 = vsel %vm123, %v176, 0
  %v205 = vsel %vm123, %v177, 0
  %v208 = vsel %vm123, %v178, 0
  %v211 = vsel %vm123, %v179, 0
  %213 = vmatpush.xpose.msra.mxu0 0.0
  %214 = vmatpush.xpose.msra.mxu0 0.0
  %215 = vmatpush.xpose.msra.mxu0 0.0
  %216 = vmatpush.xpose.msra.mxu0 0.0
  %217 = vmatpush.xpose.msra.mxu0 0.0
  %218 = vmatpush.xpose.msra.mxu0 0.0
  %219 = vmatpush.xpose.msra.mxu0 0.0
  %220 = vmatpush.xpose.msra.mxu0 %v211
  %221 = vmatpush.xpose.msra.mxu0 %v208
  %222 = vmatpush.xpose.msra.mxu0 %v205
  %223 = vmatpush.xpose.msra.mxu0 %v202
  %224 = vmatpush.xpose.msra.mxu0 %v199
  %225 = vmatpush.xpose.msra.mxu0 %v196
  %226 = vmatpush.xpose.msra.mxu0 %v193
  %227 = vmatpush.xpose.msra.mxu0 %v190
  %228 = vmatpush.xpose.msra.mxu0 %v187
  %229 = vmatmul.f32.gmra.mxu0 %v181
  %v230 = vpop.f32.mrf.mxu0
  %v231 = vadd.f32 0.0, %v230
  %232 = vmatmul.f32.gmra.mxu0 %v184
  %v233 = vpop.f32.mrf.mxu0
  %v234 = vadd.f32 0.0, %v233
  %235 = vdwg.mxu0
  %238 = vrot.lane.b32.xlu0 %v231, 104
  %v239 = vpop.permute.xlu0 %238
  %240 = vrot.lane.b32.xlu0 %v234, 104
  %v241 = vpop.permute.xlu0 %240
  %v244 = vrot.slane %v239, 7
  %v245 = vrot.slane %v241, 7
  %vm246 = vcmp.lt.s32.totalorder %v18, 1
  %v247 = vsel %vm246, %v244, %v245
  %v248 = vsel %vm246, %v245, %v244
  %v249 = vsel %vm50, %v248, 0.0
  %v250 = vsel %vm51, %v247, 0.0
  %253 = vrot.lane.b32.xlu0 %v249, 48
  %v254 = vpop.permute.xlu0 %253
  %255 = vrot.lane.b32.xlu0 %v250, 48
  %v256 = vpop.permute.xlu0 %255
  %v259 = vadd.f32 %v231, %v254
  %v260 = vadd.f32 %v234, %v256
  %vm261 = vcmp.ge.s32.totalorder %v42, 2
  %vm262 = vcmp.ge.s32.totalorder %v43, 2
  %v263 = vrot.slane %v231, 6
  %v264 = vrot.slane %v234, 6
  %vm265 = vcmp.lt.s32.totalorder %v18, 2
  %v266 = vsel %vm265, %v263, %v264
  %v267 = vsel %vm265, %v264, %v263
  %v268 = vsel %vm261, 1, 0
  %v269 = vsel %vm262, 1, 0
  %vm270 = vcmp.eq.s32.totalorder %v268, 1
  %vm271 = vcmp.eq.s32.totalorder %v269, 1
  %v272 = vsel %vm270, %v267, 0.0
  %v273 = vsel %vm271, %v266, 0.0
  %276 = vrot.lane.b32.xlu0 %v272, 48
  %v277 = vpop.permute.xlu0 %276
  %278 = vrot.lane.b32.xlu0 %v273, 48
  %v279 = vpop.permute.xlu0 %278
  %v282 = vadd.f32 %v259, %v277
  %v283 = vadd.f32 %v260, %v279
  %v284 = vmul.f32 %v282, %v282
  %v285 = vmul.f32 %v283, %v283
  %288 = vrot.lane.b32.xlu0 %v282, 80
  %v289 = vpop.permute.xlu0 %288
  %290 = vrot.lane.b32.xlu0 %v283, 80
  %v291 = vpop.permute.xlu0 %290
  %296 = vrot.lane.b32.xlu0 %v284, 104
  %v297 = vpop.permute.xlu0 %296
  %298 = vrot.lane.b32.xlu0 %v285, 104
  %v299 = vpop.permute.xlu0 %298
  %v302 = vsel %vm123, %v289, %v297
  %v303 = vsel %vm123, %v291, %v299
  %v304 = vsel %vm74, %v302, 0.0
  %v305 = vsel %vm74, %v303, 0.0
  %v306 = vadd.f32 %v304, %v305
  %v307 = vrot.slane %v306, 4
  %v308 = vadd.f32 %v306, %v307
  %v309 = vrot.slane %v308, 2
  %v310 = vadd.f32 %v308, %v309
  %v311 = vrot.slane %v310, 1
  %v312 = vadd.f32 %v310, %v311
  %v313 = vmul.f32 %v312, 0.0625
  %v314 = vmul.f32 %v313, %v313
  %316 = vrot.lane.b32.xlu0 %v314, 24
  %v317 = vpop.permute.xlu0 %316
  %v319 = vsub.f32 %v313, %v317
  %v320 = vadd.f32 %v319, 1e-05
  %v321 = vrsqrt.pop %v320
  %v322 = vmul.f32 %v321, %v320
  %v323 = vmul.f32 %v322, %v321
  %v324 = vmul.f32 0.5, %v323
  %v325 = vsub.f32 1.5, %v324
  %v326 = vmul.f32 %v321, %v325
  %vm327 = vweird.f32 %v320
  %vm328 = vweird.f32 %v321
  %vm329 = vmor %vm327, %vm328
  %v330 = vsel %vm329, %v321, %v326
  %v332 = vrot.slane %v330, 2
  %333 = vrot.lane.b32.xlu0 %v332, 104
  %v334 = vpop.permute.xlu0 %333
  %v336 = vmul.f32 %v68, %v334
  %v337 = vperm.slane %v336, 6
  %339 = vrot.lane.b32.xlu0 %v337, 48
  %v340 = vpop.permute.xlu0 %339
  %v342 = vmul.f32 %v282, %v340
  %v343 = vmul.f32 %v283, %v340
  %v344 = vmul.f32 %v313, %v336
  %v346 = vrot.slane %v344, 5
  %v348 = vsub.f32 %v69, %v346
  %v349 = vperm.slane %v348, 1
  %351 = vrot.lane.b32.xlu0 %v349, 48
  %v352 = vpop.permute.xlu0 %351
  %v354 = vadd.f32 %v342, %v352
  %v355 = vadd.f32 %v343, %v352
  %v356 = vmax.f32 %v354, 0.0
  %v357 = vmax.f32 %v355, 0.0
  %v358 = vld [vmem:[%s2 + $0x140] sm:$0xff]
  %v359 = vld [vmem:[%s2 + $0x148] sm:$0xff]
  %v360 = vld [vmem:[%s2 + $0x150] sm:$0xff]
  %v361 = vld [vmem:[%s2 + $0x158] sm:$0xff]
  %v362 = vld [vmem:[%s2 + $0x160] sm:$0xff]
  %v363 = vld [vmem:[%s2 + $0x168] sm:$0xff]
  %366 = vrot.lane.b32.xlu0 %v356, 80
  %v367 = vpop.permute.xlu0 %366
  %368 = vrot.lane.b32.xlu0 %v357, 80
  %v369 = vpop.permute.xlu0 %368
  %v370 = vsel %vm123, %v367, 0
  %v372 = vsel %vm123, %v369, 0
  %v375 = vsel %vm123, %v358, 0
  %v378 = vsel %vm123, %v359, 0
  %v381 = vsel %vm123, %v360, 0
  %v384 = vsel %vm123, %v361, 0
  %v387 = vsel %vm123, %v362, 0
  %v390 = vsel %vm123, %v363, 0
  %392 = vmatpush.xpose.msra.mxu0 0.0
  %393 = vmatpush.xpose.msra.mxu0 0.0
  %394 = vmatpush.xpose.msra.mxu0 0.0
  %395 = vmatpush.xpose.msra.mxu0 0.0
  %396 = vmatpush.xpose.msra.mxu0 0.0
  %397 = vmatpush.xpose.msra.mxu0 0.0
  %398 = vmatpush.xpose.msra.mxu0 0.0
  %399 = vmatpush.xpose.msra.mxu0 0.0
  %400 = vmatpush.xpose.msra.mxu0 0.0
  %401 = vmatpush.xpose.msra.mxu0 0.0
  %402 = vmatpush.xpose.msra.mxu0 %v390
  %403 = vmatpush.xpose.msra.mxu0 %v387
  %404 = vmatpush.xpose.msra.mxu0 %v384
  %405 = vmatpush.xpose.msra.mxu0 %v381
  %406 = vmatpush.xpose.msra.mxu0 %v378
  %407 = vmatpush.xpose.msra.mxu0 %v375
  %408 = vmatmul.f32.gmra.mxu0 %v370
  %v409 = vpop.f32.mrf.mxu0
  %v410 = vadd.f32 0.0, %v409
  %411 = vmatmul.f32.gmra.mxu0 %v372
  %v412 = vpop.f32.mrf.mxu0
  %v413 = vadd.f32 0.0, %v412
  %414 = vdwg.mxu0
  %v415 = vmul.f32 %v410, %v410
  %v416 = vmul.f32 %v413, %v413
  %419 = vrot.lane.b32.xlu0 %v415, 48
  %v420 = vpop.permute.xlu0 %419
  %421 = vrot.lane.b32.xlu0 %v416, 48
  %v422 = vpop.permute.xlu0 %421
  %v425 = vsel %vm74, %v410, %v420
  %v426 = vsel %vm74, %v413, %v422
  %vm427 = vcmask 785408
  %v428 = vsel %vm427, %v425, 0.0
  %v429 = vsel %vm427, %v426, 0.0
  %v430 = vadd.f32 %v428, %v429
  %v431 = vrot.slane %v430, 4
  %v432 = vadd.f32 %v430, %v431
  %v433 = vrot.slane %v432, 2
  %v434 = vadd.f32 %v432, %v433
  %v435 = vrot.slane %v434, 1
  %v436 = vadd.f32 %v434, %v435
  %v437 = vmul.f32 %v436, 0.0625
  %v438 = vmul.f32 %v437, %v437
  %440 = vrot.lane.b32.xlu0 %v438, 48
  %v441 = vpop.permute.xlu0 %440
  %v443 = vsub.f32 %v437, %v441
  %v444 = vadd.f32 %v443, 1e-05
  %v445 = vrsqrt.pop %v444
  %v446 = vmul.f32 %v445, %v444
  %v447 = vmul.f32 %v446, %v445
  %v448 = vmul.f32 0.5, %v447
  %v449 = vsub.f32 1.5, %v448
  %v450 = vmul.f32 %v445, %v449
  %vm451 = vweird.f32 %v444
  %vm452 = vweird.f32 %v445
  %vm453 = vmor %vm451, %vm452
  %v454 = vsel %vm453, %v445, %v450
  %v456 = vrot.slane %v454, 4
  %457 = vrot.lane.b32.xlu0 %v456, 80
  %v458 = vpop.permute.xlu0 %457
  %v460 = vmul.f32 %v69, %v458
  %v461 = vperm.slane %v460, 4
  %v462 = vmul.f32 %v410, %v461
  %v463 = vmul.f32 %v413, %v461
  %v464 = vmul.f32 %v437, %v460
  %v466 = vrot.slane %v464, 5
  %v468 = vsub.f32 %v69, %v466
  %v469 = vperm.slane %v468, 7
  %v470 = vadd.f32 %v462, %v469
  %v471 = vadd.f32 %v463, %v469
  %v472 = vadd.f32 %v470, %v66
  %v473 = vadd.f32 %v471, %v67
  %v474 = vmax.f32 %v472, 0.0
  %v475 = vmax.f32 %v473, 0.0
  %v476 = vld [vmem:[%s2 + $0x18] sm:$0xff]
  %v477 = vld [vmem:[%s2 + $0x20] sm:$0xff]
  %v478 = vld [vmem:[%s2 + $0x28] sm:$0xff]
  %v480 = vsel %vm74, %v474, 0
  %v483 = vsel %vm74, %v475, 0
  %v486 = vsel %vm74, %v476, 0
  %v489 = vsel %vm74, %v477, 0
  %v492 = vsel %vm74, %v478, 0
  %494 = vmatpush.xpose.msra.mxu0 0.0
  %495 = vmatpush.xpose.msra.mxu0 0.0
  %496 = vmatpush.xpose.msra.mxu0 0.0
  %497 = vmatpush.xpose.msra.mxu0 0.0
  %498 = vmatpush.xpose.msra.mxu0 0.0
  %499 = vmatpush.xpose.msra.mxu0 0.0
  %500 = vmatpush.xpose.msra.mxu0 0.0
  %501 = vmatpush.xpose.msra.mxu0 0.0
  %502 = vmatpush.xpose.msra.mxu0 0.0
  %503 = vmatpush.xpose.msra.mxu0 0.0
  %504 = vmatpush.xpose.msra.mxu0 0.0
  %505 = vmatpush.xpose.msra.mxu0 0.0
  %506 = vmatpush.xpose.msra.mxu0 0.0
  %507 = vmatpush.xpose.msra.mxu0 %v492
  %508 = vmatpush.xpose.msra.mxu0 %v489
  %509 = vmatpush.xpose.msra.mxu0 %v486
  %510 = vmatmul.f32.gmra.mxu0 %v480
  %v511 = vpop.f32.mrf.mxu0
  %v512 = vadd.f32 0.0, %v511
  %513 = vmatmul.f32.gmra.mxu0 %v483
  %v514 = vpop.f32.mrf.mxu0
  %v515 = vadd.f32 0.0, %v514
  %516 = vdwg.mxu0
  %v517 = vmul.f32 %v512, %v512
  %v518 = vmul.f32 %v515, %v515
  %521 = vrot.lane.b32.xlu0 %v517, 24
  %v522 = vpop.permute.xlu0 %521
  %523 = vrot.lane.b32.xlu0 %v518, 24
  %v524 = vpop.permute.xlu0 %523
  %v527 = vsel %vm123, %v512, %v522
  %v528 = vsel %vm123, %v515, %v524
  %v529 = vsel %vm74, %v527, 0.0
  %v530 = vsel %vm74, %v528, 0.0
  %v531 = vadd.f32 %v529, %v530
  %v532 = vrot.slane %v531, 4
  %v533 = vadd.f32 %v531, %v532
  %v534 = vrot.slane %v533, 2
  %v535 = vadd.f32 %v533, %v534
  %v536 = vrot.slane %v535, 1
  %v537 = vadd.f32 %v535, %v536
  %v538 = vmul.f32 %v537, 0.0625
  %v539 = vmul.f32 %v538, %v538
  %541 = vrot.lane.b32.xlu0 %v539, 24
  %v542 = vpop.permute.xlu0 %541
  %v544 = vsub.f32 %v538, %v542
  %v545 = vadd.f32 %v544, 1e-05
  %v546 = vrsqrt.pop %v545
  %v547 = vmul.f32 %v546, %v545
  %v548 = vmul.f32 %v547, %v546
  %v549 = vmul.f32 0.5, %v548
  %v550 = vsub.f32 1.5, %v549
  %v551 = vmul.f32 %v546, %v550
  %vm552 = vweird.f32 %v545
  %vm553 = vweird.f32 %v546
  %vm554 = vmor %vm552, %vm553
  %v555 = vsel %vm554, %v546, %v551
  %v557 = vrot.slane %v555, 7
  %558 = vrot.lane.b32.xlu0 %v557, 104
  %v559 = vpop.permute.xlu0 %558
  %v561 = vmul.f32 %v68, %v559
  %v562 = vperm.slane %v561, 1
  %v563 = vmul.f32 %v512, %v562
  %v564 = vmul.f32 %v515, %v562
  %v565 = vmul.f32 %v538, %v561
  %v567 = vrot.slane %v565, 5
  %v569 = vsub.f32 %v68, %v567
  %v570 = vperm.slane %v569, 4
  %v571 = vadd.f32 %v563, %v570
  %v572 = vadd.f32 %v564, %v570
  %v573 = vmax.f32 %v571, 0.0
  %v574 = vmax.f32 %v572, 0.0
  %v575 = vld [vmem:[%s2 + $0xb0] sm:$0xff]
  %v576 = vld [vmem:[%s2 + $0xb8] sm:$0xff]
  %v577 = vld [vmem:[%s2 + $0xc0] sm:$0xff]
  %v578 = vld [vmem:[%s2 + $0xc8] sm:$0xff]
  %v579 = vld [vmem:[%s2 + $0xd0] sm:$0xff]
  %v580 = vld [vmem:[%s2 + $0xd8] sm:$0xff]
  %v581 = vld [vmem:[%s2 + $0xe0] sm:$0xff]
  %v582 = vld [vmem:[%s2 + $0xe8] sm:$0xff]
  %v583 = vld [vmem:[%s2 + $0xf0] sm:$0xff]
  %v585 = vsel %vm123, %v573, 0
  %v588 = vsel %vm123, %v574, 0
  %v591 = vsel %vm123, %v575, 0
  %v594 = vsel %vm123, %v576, 0
  %v597 = vsel %vm123, %v577, 0
  %v600 = vsel %vm123, %v578, 0
  %v603 = vsel %vm123, %v579, 0
  %v606 = vsel %vm123, %v580, 0
  %v609 = vsel %vm123, %v581, 0
  %v612 = vsel %vm123, %v582, 0
  %v615 = vsel %vm123, %v583, 0
  %617 = vmatpush.xpose.msra.mxu0 0.0
  %618 = vmatpush.xpose.msra.mxu0 0.0
  %619 = vmatpush.xpose.msra.mxu0 0.0
  %620 = vmatpush.xpose.msra.mxu0 0.0
  %621 = vmatpush.xpose.msra.mxu0 0.0
  %622 = vmatpush.xpose.msra.mxu0 0.0
  %623 = vmatpush.xpose.msra.mxu0 0.0
  %624 = vmatpush.xpose.msra.mxu0 %v615
  %625 = vmatpush.xpose.msra.mxu0 %v612
  %626 = vmatpush.xpose.msra.mxu0 %v609
  %627 = vmatpush.xpose.msra.mxu0 %v606
  %628 = vmatpush.xpose.msra.mxu0 %v603
  %629 = vmatpush.xpose.msra.mxu0 %v600
  %630 = vmatpush.xpose.msra.mxu0 %v597
  %631 = vmatpush.xpose.msra.mxu0 %v594
  %632 = vmatpush.xpose.msra.mxu0 %v591
  %633 = vmatmul.f32.gmra.mxu0 %v585
  %v634 = vpop.f32.mrf.mxu0
  %v635 = vadd.f32 0.0, %v634
  %636 = vmatmul.f32.gmra.mxu0 %v588
  %v637 = vpop.f32.mrf.mxu0
  %v638 = vadd.f32 0.0, %v637
  %639 = vdwg.mxu0
  %642 = vrot.lane.b32.xlu0 %v635, 104
  %v643 = vpop.permute.xlu0 %642
  %644 = vrot.lane.b32.xlu0 %v638, 104
  %v645 = vpop.permute.xlu0 %644
  %v648 = vrot.slane %v643, 6
  %v649 = vrot.slane %v645, 6
  %v650 = vsel %vm265, %v648, %v649
  %v651 = vsel %vm265, %v649, %v648
  %v652 = vsel %vm270, %v651, 0.0
  %v653 = vsel %vm271, %v650, 0.0
  %656 = vrot.lane.b32.xlu0 %v652, 48
  %v657 = vpop.permute.xlu0 %656
  %658 = vrot.lane.b32.xlu0 %v653, 48
  %v659 = vpop.permute.xlu0 %658
  %v662 = vadd.f32 %v635, %v657
  %v663 = vadd.f32 %v638, %v659
  %vm664 = vcmp.ge.s32.totalorder %v42, 4
  %vm665 = vcmp.ge.s32.totalorder %v43, 4
  %v666 = vrot.slane %v635, 4
  %v667 = vrot.slane %v638, 4
  %vm668 = vcmp.lt.s32.totalorder %v18, 4
  %v669 = vsel %vm668, %v666, %v667
  %v670 = vsel %vm668, %v667, %v666
  %v671 = vsel %vm664, 1, 0
  %v672 = vsel %vm665, 1, 0
  %vm673 = vcmp.eq.s32.totalorder %v671, 1
  %vm674 = vcmp.eq.s32.totalorder %v672, 1
  %v675 = vsel %vm673, %v670, 0.0
  %v676 = vsel %vm674, %v669, 0.0
  %679 = vrot.lane.b32.xlu0 %v675, 48
  %v680 = vpop.permute.xlu0 %679
  %681 = vrot.lane.b32.xlu0 %v676, 48
  %v682 = vpop.permute.xlu0 %681
  %v685 = vadd.f32 %v662, %v680
  %v686 = vadd.f32 %v663, %v682
  %v687 = vmul.f32 %v685, %v685
  %v688 = vmul.f32 %v686, %v686
  %691 = vrot.lane.b32.xlu0 %v685, 80
  %v692 = vpop.permute.xlu0 %691
  %693 = vrot.lane.b32.xlu0 %v686, 80
  %v694 = vpop.permute.xlu0 %693
  %699 = vrot.lane.b32.xlu0 %v687, 104
  %v700 = vpop.permute.xlu0 %699
  %701 = vrot.lane.b32.xlu0 %v688, 104
  %v702 = vpop.permute.xlu0 %701
  %v705 = vsel %vm123, %v692, %v700
  %v706 = vsel %vm123, %v694, %v702
  %v707 = vsel %vm74, %v705, 0.0
  %v708 = vsel %vm74, %v706, 0.0
  %v709 = vadd.f32 %v707, %v708
  %v710 = vrot.slane %v709, 4
  %v711 = vadd.f32 %v709, %v710
  %v712 = vrot.slane %v711, 2
  %v713 = vadd.f32 %v711, %v712
  %v714 = vrot.slane %v713, 1
  %v715 = vadd.f32 %v713, %v714
  %v716 = vmul.f32 %v715, 0.0625
  %v717 = vmul.f32 %v716, %v716
  %719 = vrot.lane.b32.xlu0 %v717, 24
  %v720 = vpop.permute.xlu0 %719
  %v722 = vsub.f32 %v716, %v720
  %v723 = vadd.f32 %v722, 1e-05
  %v724 = vrsqrt.pop %v723
  %v725 = vmul.f32 %v724, %v723
  %v726 = vmul.f32 %v725, %v724
  %v727 = vmul.f32 0.5, %v726
  %v728 = vsub.f32 1.5, %v727
  %v729 = vmul.f32 %v724, %v728
  %vm730 = vweird.f32 %v723
  %vm731 = vweird.f32 %v724
  %vm732 = vmor %vm730, %vm731
  %v733 = vsel %vm732, %v724, %v729
  %v735 = vrot.slane %v733, 1
  %736 = vrot.lane.b32.xlu0 %v735, 104
  %v737 = vpop.permute.xlu0 %736
  %v739 = vmul.f32 %v68, %v737
  %v740 = vperm.slane %v739, 7
  %742 = vrot.lane.b32.xlu0 %v740, 48
  %v743 = vpop.permute.xlu0 %742
  %v745 = vmul.f32 %v685, %v743
  %v746 = vmul.f32 %v686, %v743
  %v747 = vmul.f32 %v716, %v739
  %v749 = vrot.slane %v747, 5
  %v751 = vsub.f32 %v69, %v749
  %v752 = vperm.slane %v751, 2
  %754 = vrot.lane.b32.xlu0 %v752, 48
  %v755 = vpop.permute.xlu0 %754
  %v757 = vadd.f32 %v745, %v755
  %v758 = vadd.f32 %v746, %v755
  %v759 = vmax.f32 %v757, 0.0
  %v760 = vmax.f32 %v758, 0.0
  %v761 = vld [vmem:[%s2 + $0x170] sm:$0xff]
  %v762 = vld [vmem:[%s2 + $0x178] sm:$0xff]
  %v763 = vld [vmem:[%s2 + $0x180] sm:$0xff]
  %v764 = vld [vmem:[%s2 + $0x188] sm:$0xff]
  %v765 = vld [vmem:[%s2 + $0x190] sm:$0xff]
  %v766 = vld [vmem:[%s2 + $0x198] sm:$0xff]
  %769 = vrot.lane.b32.xlu0 %v759, 80
  %v770 = vpop.permute.xlu0 %769
  %771 = vrot.lane.b32.xlu0 %v760, 80
  %v772 = vpop.permute.xlu0 %771
  %v773 = vsel %vm123, %v770, 0
  %v775 = vsel %vm123, %v772, 0
  %v778 = vsel %vm123, %v761, 0
  %v781 = vsel %vm123, %v762, 0
  %v784 = vsel %vm123, %v763, 0
  %v787 = vsel %vm123, %v764, 0
  %v790 = vsel %vm123, %v765, 0
  %v793 = vsel %vm123, %v766, 0
  %795 = vmatpush.xpose.msra.mxu0 0.0
  %796 = vmatpush.xpose.msra.mxu0 0.0
  %797 = vmatpush.xpose.msra.mxu0 0.0
  %798 = vmatpush.xpose.msra.mxu0 0.0
  %799 = vmatpush.xpose.msra.mxu0 0.0
  %800 = vmatpush.xpose.msra.mxu0 0.0
  %801 = vmatpush.xpose.msra.mxu0 0.0
  %802 = vmatpush.xpose.msra.mxu0 0.0
  %803 = vmatpush.xpose.msra.mxu0 0.0
  %804 = vmatpush.xpose.msra.mxu0 0.0
  %805 = vmatpush.xpose.msra.mxu0 %v793
  %806 = vmatpush.xpose.msra.mxu0 %v790
  %807 = vmatpush.xpose.msra.mxu0 %v787
  %808 = vmatpush.xpose.msra.mxu0 %v784
  %809 = vmatpush.xpose.msra.mxu0 %v781
  %810 = vmatpush.xpose.msra.mxu0 %v778
  %811 = vmatmul.f32.gmra.mxu0 %v773
  %v812 = vpop.f32.mrf.mxu0
  %v813 = vadd.f32 0.0, %v812
  %814 = vmatmul.f32.gmra.mxu0 %v775
  %v815 = vpop.f32.mrf.mxu0
  %v816 = vadd.f32 0.0, %v815
  %817 = vdwg.mxu0
  %v818 = vmul.f32 %v813, %v813
  %v819 = vmul.f32 %v816, %v816
  %822 = vrot.lane.b32.xlu0 %v818, 48
  %v823 = vpop.permute.xlu0 %822
  %824 = vrot.lane.b32.xlu0 %v819, 48
  %v825 = vpop.permute.xlu0 %824
  %v828 = vsel %vm74, %v813, %v823
  %v829 = vsel %vm74, %v816, %v825
  %v830 = vsel %vm427, %v828, 0.0
  %v831 = vsel %vm427, %v829, 0.0
  %v832 = vadd.f32 %v830, %v831
  %v833 = vrot.slane %v832, 4
  %v834 = vadd.f32 %v832, %v833
  %v835 = vrot.slane %v834, 2
  %v836 = vadd.f32 %v834, %v835
  %v837 = vrot.slane %v836, 1
  %v838 = vadd.f32 %v836, %v837
  %v839 = vmul.f32 %v838, 0.0625
  %v840 = vmul.f32 %v839, %v839
  %842 = vrot.lane.b32.xlu0 %v840, 48
  %v843 = vpop.permute.xlu0 %842
  %v845 = vsub.f32 %v839, %v843
  %v846 = vadd.f32 %v845, 1e-05
  %v847 = vrsqrt.pop %v846
  %v848 = vmul.f32 %v847, %v846
  %v849 = vmul.f32 %v848, %v847
  %v850 = vmul.f32 0.5, %v849
  %v851 = vsub.f32 1.5, %v850
  %v852 = vmul.f32 %v847, %v851
  %vm853 = vweird.f32 %v846
  %vm854 = vweird.f32 %v847
  %vm855 = vmor %vm853, %vm854
  %v856 = vsel %vm855, %v847, %v852
  %v858 = vrot.slane %v856, 3
  %859 = vrot.lane.b32.xlu0 %v858, 80
  %v860 = vpop.permute.xlu0 %859
  %v862 = vmul.f32 %v69, %v860
  %v863 = vperm.slane %v862, 5
  %v864 = vmul.f32 %v813, %v863
  %v865 = vmul.f32 %v816, %v863
  %v866 = vmul.f32 %v839, %v862
  %v868 = vrot.slane %v866, 5
  %v870 = vsub.f32 %v70, %v868
  %v871 = vperm.slane %v870, 0
  %v872 = vadd.f32 %v864, %v871
  %v873 = vadd.f32 %v865, %v871
  %v874 = vadd.f32 %v872, %v474
  %v875 = vadd.f32 %v873, %v475
  %v876 = vmax.f32 %v874, 0.0
  %v877 = vmax.f32 %v875, 0.0
  %v878 = vld [vmem:[%s2 + $0x30] sm:$0xff]
  %v879 = vld [vmem:[%s2 + $0x38] sm:$0xff]
  %v880 = vld [vmem:[%s2 + $0x40] sm:$0xff]
  %v882 = vsel %vm74, %v876, 0
  %v885 = vsel %vm74, %v877, 0
  %v888 = vsel %vm74, %v878, 0
  %v891 = vsel %vm74, %v879, 0
  %v894 = vsel %vm74, %v880, 0
  %896 = vmatpush.xpose.msra.mxu0 0.0
  %897 = vmatpush.xpose.msra.mxu0 0.0
  %898 = vmatpush.xpose.msra.mxu0 0.0
  %899 = vmatpush.xpose.msra.mxu0 0.0
  %900 = vmatpush.xpose.msra.mxu0 0.0
  %901 = vmatpush.xpose.msra.mxu0 0.0
  %902 = vmatpush.xpose.msra.mxu0 0.0
  %903 = vmatpush.xpose.msra.mxu0 0.0
  %904 = vmatpush.xpose.msra.mxu0 0.0
  %905 = vmatpush.xpose.msra.mxu0 0.0
  %906 = vmatpush.xpose.msra.mxu0 0.0
  %907 = vmatpush.xpose.msra.mxu0 0.0
  %908 = vmatpush.xpose.msra.mxu0 0.0
  %909 = vmatpush.xpose.msra.mxu0 %v894
  %910 = vmatpush.xpose.msra.mxu0 %v891
  %911 = vmatpush.xpose.msra.mxu0 %v888
  %912 = vmatmul.f32.gmra.mxu0 %v882
  %v913 = vpop.f32.mrf.mxu0
  %v914 = vadd.f32 0.0, %v913
  %915 = vmatmul.f32.gmra.mxu0 %v885
  %v916 = vpop.f32.mrf.mxu0
  %v917 = vadd.f32 0.0, %v916
  %918 = vdwg.mxu0
  %v919 = vmul.f32 %v914, %v914
  %v920 = vmul.f32 %v917, %v917
  %923 = vrot.lane.b32.xlu0 %v919, 24
  %v924 = vpop.permute.xlu0 %923
  %925 = vrot.lane.b32.xlu0 %v920, 24
  %v926 = vpop.permute.xlu0 %925
  %v929 = vsel %vm123, %v914, %v924
  %v930 = vsel %vm123, %v917, %v926
  %v931 = vsel %vm74, %v929, 0.0
  %v932 = vsel %vm74, %v930, 0.0
  %v933 = vadd.f32 %v931, %v932
  %v934 = vrot.slane %v933, 4
  %v935 = vadd.f32 %v933, %v934
  %v936 = vrot.slane %v935, 2
  %v937 = vadd.f32 %v935, %v936
  %v938 = vrot.slane %v937, 1
  %v939 = vadd.f32 %v937, %v938
  %v940 = vmul.f32 %v939, 0.0625
  %v941 = vmul.f32 %v940, %v940
  %943 = vrot.lane.b32.xlu0 %v941, 24
  %v944 = vpop.permute.xlu0 %943
  %v946 = vsub.f32 %v940, %v944
  %v947 = vadd.f32 %v946, 1e-05
  %v948 = vrsqrt.pop %v947
  %v949 = vmul.f32 %v948, %v947
  %v950 = vmul.f32 %v949, %v948
  %v951 = vmul.f32 0.5, %v950
  %v952 = vsub.f32 1.5, %v951
  %v953 = vmul.f32 %v948, %v952
  %vm954 = vweird.f32 %v947
  %vm955 = vweird.f32 %v948
  %vm956 = vmor %vm954, %vm955
  %v957 = vsel %vm956, %v948, %v953
  %v959 = vrot.slane %v957, 6
  %960 = vrot.lane.b32.xlu0 %v959, 104
  %v961 = vpop.permute.xlu0 %960
  %v963 = vmul.f32 %v68, %v961
  %v964 = vperm.slane %v963, 2
  %v965 = vmul.f32 %v914, %v964
  %v966 = vmul.f32 %v917, %v964
  %v967 = vmul.f32 %v940, %v963
  %v969 = vrot.slane %v967, 5
  %v971 = vsub.f32 %v68, %v969
  %v972 = vperm.slane %v971, 5
  %v973 = vadd.f32 %v965, %v972
  %v974 = vadd.f32 %v966, %v972
  %v975 = vmax.f32 %v973, 0.0
  %v976 = vmax.f32 %v974, 0.0
  %v977 = vld [vmem:[%s2 + $0xf8] sm:$0xff]
  %v978 = vld [vmem:[%s2 + $0x100] sm:$0xff]
  %v979 = vld [vmem:[%s2 + $0x108] sm:$0xff]
  %v980 = vld [vmem:[%s2 + $0x110] sm:$0xff]
  %v981 = vld [vmem:[%s2 + $0x118] sm:$0xff]
  %v982 = vld [vmem:[%s2 + $0x120] sm:$0xff]
  %v983 = vld [vmem:[%s2 + $0x128] sm:$0xff]
  %v984 = vld [vmem:[%s2 + $0x130] sm:$0xff]
  %v985 = vld [vmem:[%s2 + $0x138] sm:$0xff]
  %v987 = vsel %vm123, %v975, 0
  %v990 = vsel %vm123, %v976, 0
  %v993 = vsel %vm123, %v977, 0
  %v996 = vsel %vm123, %v978, 0
  %v999 = vsel %vm123, %v979, 0
  %v1002 = vsel %vm123, %v980, 0
  %v1005 = vsel %vm123, %v981, 0
  %v1008 = vsel %vm123, %v982, 0
  %v1011 = vsel %vm123, %v983, 0
  %v1014 = vsel %vm123, %v984, 0
  %v1017 = vsel %vm123, %v985, 0
  %1019 = vmatpush.xpose.msra.mxu0 0.0
  %1020 = vmatpush.xpose.msra.mxu0 0.0
  %1021 = vmatpush.xpose.msra.mxu0 0.0
  %1022 = vmatpush.xpose.msra.mxu0 0.0
  %1023 = vmatpush.xpose.msra.mxu0 0.0
  %1024 = vmatpush.xpose.msra.mxu0 0.0
  %1025 = vmatpush.xpose.msra.mxu0 0.0
  %1026 = vmatpush.xpose.msra.mxu0 %v1017
  %1027 = vmatpush.xpose.msra.mxu0 %v1014
  %1028 = vmatpush.xpose.msra.mxu0 %v1011
  %1029 = vmatpush.xpose.msra.mxu0 %v1008
  %1030 = vmatpush.xpose.msra.mxu0 %v1005
  %1031 = vmatpush.xpose.msra.mxu0 %v1002
  %1032 = vmatpush.xpose.msra.mxu0 %v999
  %1033 = vmatpush.xpose.msra.mxu0 %v996
  %1034 = vmatpush.xpose.msra.mxu0 %v993
  %1035 = vmatmul.f32.gmra.mxu0 %v987
  %v1036 = vpop.f32.mrf.mxu0
  %v1037 = vadd.f32 0.0, %v1036
  %1038 = vmatmul.f32.gmra.mxu0 %v990
  %v1039 = vpop.f32.mrf.mxu0
  %v1040 = vadd.f32 0.0, %v1039
  %1041 = vdwg.mxu0
  %1044 = vrot.lane.b32.xlu0 %v1037, 104
  %v1045 = vpop.permute.xlu0 %1044
  %1046 = vrot.lane.b32.xlu0 %v1040, 104
  %v1047 = vpop.permute.xlu0 %1046
  %v1050 = vrot.slane %v1045, 4
  %v1051 = vrot.slane %v1047, 4
  %v1052 = vsel %vm668, %v1050, %v1051
  %v1053 = vsel %vm668, %v1051, %v1050
  %v1054 = vsel %vm673, %v1053, 0.0
  %v1055 = vsel %vm674, %v1052, 0.0
  %1058 = vrot.lane.b32.xlu0 %v1054, 48
  %v1059 = vpop.permute.xlu0 %1058
  %1060 = vrot.lane.b32.xlu0 %v1055, 48
  %v1061 = vpop.permute.xlu0 %1060
  %v1064 = vadd.f32 %v1037, %v1059
  %v1065 = vadd.f32 %v1040, %v1061
  %v1066 = vmul.f32 %v1064, %v1064
  %v1067 = vmul.f32 %v1065, %v1065
  %1070 = vrot.lane.b32.xlu0 %v1064, 80
  %v1071 = vpop.permute.xlu0 %1070
  %1072 = vrot.lane.b32.xlu0 %v1065, 80
  %v1073 = vpop.permute.xlu0 %1072
  %1078 = vrot.lane.b32.xlu0 %v1066, 104
  %v1079 = vpop.permute.xlu0 %1078
  %1080 = vrot.lane.b32.xlu0 %v1067, 104
  %v1081 = vpop.permute.xlu0 %1080
  %v1084 = vsel %vm123, %v1071, %v1079
  %v1085 = vsel %vm123, %v1073, %v1081
  %v1086 = vsel %vm74, %v1084, 0.0
  %v1087 = vsel %vm74, %v1085, 0.0
  %v1088 = vadd.f32 %v1086, %v1087
  %v1089 = vrot.slane %v1088, 4
  %v1090 = vadd.f32 %v1088, %v1089
  %v1091 = vrot.slane %v1090, 2
  %v1092 = vadd.f32 %v1090, %v1091
  %v1093 = vrot.slane %v1092, 1
  %v1094 = vadd.f32 %v1092, %v1093
  %v1095 = vmul.f32 %v1094, 0.0625
  %v1096 = vmul.f32 %v1095, %v1095
  %1098 = vrot.lane.b32.xlu0 %v1096, 24
  %v1099 = vpop.permute.xlu0 %1098
  %v1101 = vsub.f32 %v1095, %v1099
  %v1102 = vadd.f32 %v1101, 1e-05
  %v1103 = vrsqrt.pop %v1102
  %v1104 = vmul.f32 %v1103, %v1102
  %v1105 = vmul.f32 %v1104, %v1103
  %v1106 = vmul.f32 0.5, %v1105
  %v1107 = vsub.f32 1.5, %v1106
  %v1108 = vmul.f32 %v1103, %v1107
  %vm1109 = vweird.f32 %v1102
  %vm1110 = vweird.f32 %v1103
  %vm1111 = vmor %vm1109, %vm1110
  %v1112 = vsel %vm1111, %v1103, %v1108
  %1114 = vrot.lane.b32.xlu0 %v1112, 104
  %v1115 = vpop.permute.xlu0 %1114
  %v1117 = vmul.f32 %v69, %v1115
  %v1118 = vperm.slane %v1117, 0
  %1120 = vrot.lane.b32.xlu0 %v1118, 48
  %v1121 = vpop.permute.xlu0 %1120
  %v1123 = vmul.f32 %v1064, %v1121
  %v1124 = vmul.f32 %v1065, %v1121
  %v1125 = vmul.f32 %v1095, %v1117
  %v1127 = vrot.slane %v1125, 5
  %v1129 = vsub.f32 %v69, %v1127
  %v1130 = vperm.slane %v1129, 3
  %1132 = vrot.lane.b32.xlu0 %v1130, 48
  %v1133 = vpop.permute.xlu0 %1132
  %v1135 = vadd.f32 %v1123, %v1133
  %v1136 = vadd.f32 %v1124, %v1133
  %v1137 = vmax.f32 %v1135, 0.0
  %v1138 = vmax.f32 %v1136, 0.0
  %v1139 = vld [vmem:[%s2 + $0x1a0] sm:$0xff]
  %v1140 = vld [vmem:[%s2 + $0x1a8] sm:$0xff]
  %v1141 = vld [vmem:[%s2 + $0x1b0] sm:$0xff]
  %v1142 = vld [vmem:[%s2 + $0x1b8] sm:$0xff]
  %v1143 = vld [vmem:[%s2 + $0x1c0] sm:$0xff]
  %v1144 = vld [vmem:[%s2 + $0x1c8] sm:$0xff]
  %1147 = vrot.lane.b32.xlu0 %v1137, 80
  %v1148 = vpop.permute.xlu0 %1147
  %1149 = vrot.lane.b32.xlu0 %v1138, 80
  %v1150 = vpop.permute.xlu0 %1149
  %v1151 = vsel %vm123, %v1148, 0
  %v1153 = vsel %vm123, %v1150, 0
  %v1156 = vsel %vm123, %v1139, 0
  %v1159 = vsel %vm123, %v1140, 0
  %v1162 = vsel %vm123, %v1141, 0
  %v1165 = vsel %vm123, %v1142, 0
  %v1168 = vsel %vm123, %v1143, 0
  %v1171 = vsel %vm123, %v1144, 0
  %1173 = vmatpush.xpose.msra.mxu0 0.0
  %1174 = vmatpush.xpose.msra.mxu0 0.0
  %1175 = vmatpush.xpose.msra.mxu0 0.0
  %1176 = vmatpush.xpose.msra.mxu0 0.0
  %1177 = vmatpush.xpose.msra.mxu0 0.0
  %1178 = vmatpush.xpose.msra.mxu0 0.0
  %1179 = vmatpush.xpose.msra.mxu0 0.0
  %1180 = vmatpush.xpose.msra.mxu0 0.0
  %1181 = vmatpush.xpose.msra.mxu0 0.0
  %1182 = vmatpush.xpose.msra.mxu0 0.0
  %1183 = vmatpush.xpose.msra.mxu0 %v1171
  %1184 = vmatpush.xpose.msra.mxu0 %v1168
  %1185 = vmatpush.xpose.msra.mxu0 %v1165
  %1186 = vmatpush.xpose.msra.mxu0 %v1162
  %1187 = vmatpush.xpose.msra.mxu0 %v1159
  %1188 = vmatpush.xpose.msra.mxu0 %v1156
  %1189 = vmatmul.f32.gmra.mxu0 %v1151
  %v1190 = vpop.f32.mrf.mxu0
  %v1191 = vadd.f32 0.0, %v1190
  %1192 = vmatmul.f32.gmra.mxu0 %v1153
  %v1193 = vpop.f32.mrf.mxu0
  %v1194 = vadd.f32 0.0, %v1193
  %1195 = vdwg.mxu0
  %v1196 = vmul.f32 %v1191, %v1191
  %v1197 = vmul.f32 %v1194, %v1194
  %1200 = vrot.lane.b32.xlu0 %v1196, 48
  %v1201 = vpop.permute.xlu0 %1200
  %1202 = vrot.lane.b32.xlu0 %v1197, 48
  %v1203 = vpop.permute.xlu0 %1202
  %v1206 = vsel %vm74, %v1191, %v1201
  %v1207 = vsel %vm74, %v1194, %v1203
  %v1208 = vsel %vm427, %v1206, 0.0
  %v1209 = vsel %vm427, %v1207, 0.0
  %v1210 = vadd.f32 %v1208, %v1209
  %v1211 = vrot.slane %v1210, 4
  %v1212 = vadd.f32 %v1210, %v1211
  %v1213 = vrot.slane %v1212, 2
  %v1214 = vadd.f32 %v1212, %v1213
  %v1215 = vrot.slane %v1214, 1
  %v1216 = vadd.f32 %v1214, %v1215
  %v1217 = vmul.f32 %v1216, 0.0625
  %v1218 = vmul.f32 %v1217, %v1217
  %1220 = vrot.lane.b32.xlu0 %v1218, 48
  %v1221 = vpop.permute.xlu0 %1220
  %v1223 = vsub.f32 %v1217, %v1221
  %v1224 = vadd.f32 %v1223, 1e-05
  %v1225 = vrsqrt.pop %v1224
  %v1226 = vmul.f32 %v1225, %v1224
  %v1227 = vmul.f32 %v1226, %v1225
  %v1228 = vmul.f32 0.5, %v1227
  %v1229 = vsub.f32 1.5, %v1228
  %v1230 = vmul.f32 %v1225, %v1229
  %vm1231 = vweird.f32 %v1224
  %vm1232 = vweird.f32 %v1225
  %vm1233 = vmor %vm1231, %vm1232
  %v1234 = vsel %vm1233, %v1225, %v1230
  %v1236 = vrot.slane %v1234, 2
  %1237 = vrot.lane.b32.xlu0 %v1236, 80
  %v1238 = vpop.permute.xlu0 %1237
  %v1240 = vmul.f32 %v69, %v1238
  %v1241 = vperm.slane %v1240, 6
  %v1242 = vmul.f32 %v1191, %v1241
  %v1243 = vmul.f32 %v1194, %v1241
  %v1244 = vmul.f32 %v1217, %v1240
  %v1246 = vrot.slane %v1244, 5
  %v1248 = vsub.f32 %v70, %v1246
  %v1249 = vperm.slane %v1248, 1
  %v1250 = vadd.f32 %v1242, %v1249
  %v1251 = vadd.f32 %v1243, %v1249
  %v1252 = vadd.f32 %v1250, %v876
  %v1253 = vadd.f32 %v1251, %v877
  %v1254 = vmax.f32 %v1252, 0.0
  %v1255 = vmax.f32 %v1253, 0.0
  %v1256 = vld [vmem:[%s2 + $0x48] sm:$0xff]
  %v1257 = vld [vmem:[%s2 + $0x50] sm:$0xff]
  %v1258 = vld [vmem:[%s2 + $0x58] sm:$0xff]
  %v1259 = vld [vmem:[%s2 + $0x60] sm:$0xff]
  %v1260 = vperm.slane %v70, 2
  %v1262 = vsel %vm74, %v1254, 0
  %v1265 = vsel %vm74, %v1255, 0
  %v1268 = vsel %vm74, %v1256, 0
  %v1271 = vsel %vm74, %v1257, 0
  %v1274 = vsel %vm74, %v1258, 0
  %v1277 = vsel %vm74, %v1259, 0
  %1279 = vmatpush.xpose.msra.mxu0 0.0
  %1280 = vmatpush.xpose.msra.mxu0 0.0
  %1281 = vmatpush.xpose.msra.mxu0 0.0
  %1282 = vmatpush.xpose.msra.mxu0 0.0
  %1283 = vmatpush.xpose.msra.mxu0 0.0
  %1284 = vmatpush.xpose.msra.mxu0 0.0
  %1285 = vmatpush.xpose.msra.mxu0 0.0
  %1286 = vmatpush.xpose.msra.mxu0 0.0
  %1287 = vmatpush.xpose.msra.mxu0 0.0
  %1288 = vmatpush.xpose.msra.mxu0 0.0
  %1289 = vmatpush.xpose.msra.mxu0 0.0
  %1290 = vmatpush.xpose.msra.mxu0 0.0
  %1291 = vmatpush.xpose.msra.mxu0 %v1277
  %1292 = vmatpush.xpose.msra.mxu0 %v1274
  %1293 = vmatpush.xpose.msra.mxu0 %v1271
  %1294 = vmatpush.xpose.msra.mxu0 %v1268
  %1295 = vmatmul.f32.gmra.mxu0 %v1262
  %v1296 = vpop.f32.mrf.mxu0
  %v1297 = vadd.f32 %v1260, %v1296
  %1298 = vmatmul.f32.gmra.mxu0 %v1265
  %v1299 = vpop.f32.mrf.mxu0
  %v1300 = vadd.f32 %v1260, %v1299
  %1301 = vdwg.mxu0
  %vm1302 = vcmask 253952
  %1303 = vst.msk [vmem:[%s4] sm:$0x1] %vm1302, 0.0
  %1304 = vst.msk [vmem:[%s4 + $0x10] sm:$0x1] %vm1302, 0.0
  %1305 = vst.msk [vmem:[%s4 + $0x1] sm:$0xff] %vm65, %v1297
  %1306 = vst.msk [vmem:[%s4 + $0x11] sm:$0xff] %vm65, %v1300
  // Predicated region
  $region18: #{dilated_cnn_forward.1} parent=0 // pred_check
    _
  $region19: #{dilated_cnn_forward.1} parent=0 // pred_check_branch
    %1308 = sbr.rel (0) target = $region21
  $region20: #{dilated_cnn_forward.1} parent=0 // pred_region
    _
  $region21: #{dilated_cnn_forward.1} parent=0 // pred_fallthru
    _
  // Predicated region
  $region22: #{dilated_cnn_forward.1} parent=0 // pred_check
    _
  $region23: #{dilated_cnn_forward.1} parent=0 // pred_check_branch
    %1310 = sbr.rel (0) target = $region25
  $region24: #{dilated_cnn_forward.1} parent=0 // pred_region
    _
  $region25: #{dilated_cnn_forward.1} parent=0 // pred_fallthru
    _

</llo_original>
